<compile_context>
chip_gen: v6e
topology: v6e:2x2x1
jax: 0.10.0
libtpu: 0.0.40
codegen_flags: <defaults>
</compile_context>

<pallas_src>
import functools

import jax
import jax.numpy as jnp
from jax.experimental import pallas as pl
from jax.experimental.pallas import tpu as pltpu


def _round_up(n, m):
    return (n + m - 1) // m * m


# ----------------------------- Pallas kernel --------------------------------

def vae_fused_kernel(x_ref, w1_ref, b1_ref, wml_ref, bml_ref,
                     w2_ref, b2_ref, w3_ref, b3_ref, eps_ref,
                     mu_ref, lv_ref, z_ref, xhat_ref, *, latent):
    # ---------------- encoder ----------------
    # h1 = relu(x @ W1 + b1)   (bf16 operands, f32 MXU accumulation)
    h1 = jnp.dot(x_ref[...].astype(jnp.bfloat16), w1_ref[...],
                 preferred_element_type=jnp.float32)
    h1 = jnp.maximum(h1 + b1_ref[...], 0.0)

    # fused mu|log_var head: one N = 2*latent matmul, then slice.
    ml = jnp.dot(h1.astype(jnp.bfloat16), wml_ref[...],
                 preferred_element_type=jnp.float32) + bml_ref[...]
    mu = ml[:, :latent]
    lv = ml[:, latent:]
    mu_ref[...] = mu
    lv_ref[...] = lv

    # reparameterization: z = mu + sigma * eps  (f32 elementwise)
    z = mu + jnp.exp(0.5 * lv) * eps_ref[...]
    z_ref[...] = z

    # ---------------- decoder ----------------
    h2 = jnp.dot(z.astype(jnp.bfloat16), w2_ref[...],
                 preferred_element_type=jnp.float32)
    h2 = jnp.maximum(h2 + b2_ref[...], 0.0)
    logits = jnp.dot(h2.astype(jnp.bfloat16), w3_ref[...],
                     preferred_element_type=jnp.float32) + b3_ref[...]
    xhat_ref[...] = jax.nn.sigmoid(logits)


# ------------------------------- Wrapper -------------------------------------

def vae_forward(x_nchw, enc_params, dec_params, eps):
    """Equivalent of VAE.forward: returns {**encoder_output, 'x_hat': decoding}."""
    B, C, H, W = x_nchw.shape
    D = C * H * W
    x_flat = x_nchw.reshape(B, D).astype(jnp.float32)     # glue: flatten NCHW

    hidden = enc_params["W1"].shape[1]
    latent = enc_params["Wml"].shape[1] // 2

    # Batch tile: >= 8 f32 sublanes (capped at 128); pad batch to a multiple so
    # every tile is sublane-dense and stores are unmasked.
    tile_b = 128 if B >= 128 else _round_up(max(B, 1), 8)
    b_pad = _round_up(B, tile_b)
    if b_pad != B:
        x_flat = jnp.pad(x_flat, ((0, b_pad - B), (0, 0)))
        eps = jnp.pad(eps, ((0, b_pad - B), (0, 0)))
    grid = (b_pad // tile_b,)

    # activation tiles march over the batch; weights stay resident (block (0,0)).
    def row_spec(n):
        return pl.BlockSpec((tile_b, n), lambda i: (i, 0))

    def w_spec(shape):
        return pl.BlockSpec(shape, lambda i: (0, 0))

    out_shapes = (
        jax.ShapeDtypeStruct((b_pad, latent), jnp.float32),   # mu
        jax.ShapeDtypeStruct((b_pad, latent), jnp.float32),   # log_var
        jax.ShapeDtypeStruct((b_pad, latent), jnp.float32),   # z
        jax.ShapeDtypeStruct((b_pad, D), jnp.float32),        # x_hat (flat)
    )

    mu, lv, z, x_hat_flat = pl.pallas_call(
        functools.partial(vae_fused_kernel, latent=latent),
        out_shape=out_shapes,
        grid=grid,
        in_specs=[
            row_spec(D),                      # x
            w_spec((D, hidden)),              # W1  (bf16)
            w_spec((1, hidden)),              # b1  (f32)
            w_spec((hidden, 2 * latent)),     # Wml (bf16, mu|lv fused)
            w_spec((1, 2 * latent)),          # bml (f32)
            w_spec((latent, hidden)),         # W2  (bf16)
            w_spec((1, hidden)),              # b2  (f32)
            w_spec((hidden, D)),              # W3  (bf16)
            w_spec((1, D)),                   # b3  (f32)
            row_spec(latent),                 # eps
        ],
        out_specs=(
            row_spec(latent),                 # mu
            row_spec(latent),                 # log_var
            row_spec(latent),                 # z
            row_spec(D),                      # x_hat
        ),
        compiler_params=pltpu.CompilerParams(
            dimension_semantics=("parallel",),   # shards batch tiles across TCs on v7x
        ),
    )(x_flat, enc_params["W1"], enc_params["b1"], enc_params["Wml"],
      enc_params["bml"], dec_params["W2"], dec_params["b2"],
      dec_params["W3"], dec_params["b3"], eps)

    mu, lv, z = mu[:B], lv[:B], z[:B]
    x_hat = x_hat_flat[:B].reshape(B, C, H, W)               # glue: back to NCHW
    return {"z": z, "mu": mu, "log_var": lv, "x_hat": x_hat}


# --------------------------- Parameter creation ------------------------------

def init_params(key, d_in, hidden, latent):
    ks = jax.random.split(key, 5)
    s = lambda fan_in: 1.0 / jnp.sqrt(jnp.float32(fan_in))

    def w(k, shape, fan_in):
        return jax.random.uniform(
            k, shape, jnp.float32, -s(fan_in), s(fan_in)).astype(jnp.bfloat16)

    enc = {
        "W1":  w(ks[0], (d_in, hidden), d_in),
        "b1":  jnp.zeros((1, hidden), jnp.float32),
        # fused [Wmu | Wlv] -> single (hidden, 2*latent) weight
        "Wml": jnp.concatenate([w(ks[1], (hidden, latent), hidden),
                                w(ks[2], (hidden, latent), hidden)], axis=1),
        "bml": jnp.zeros((1, 2 * latent), jnp.float32),
    }
    dec = {
        "W2": w(ks[3], (latent, hidden), latent),
        "b2": jnp.zeros((1, hidden), jnp.float32),
        "W3": w(ks[4], (hidden, d_in), hidden),
        "b3": jnp.zeros((1, d_in), jnp.float32),
    }
    return enc, dec


# ------------------------- Pure-JAX reference (check) ------------------------

def vae_reference(x_nchw, enc_params, dec_params, eps):
    B, C, H, W = x_nchw.shape
    x = x_nchw.reshape(B, C * H * W).astype(jnp.float32)
    latent = enc_params["Wml"].shape[1] // 2
    h1 = jax.nn.relu(x @ enc_params["W1"].astype(jnp.float32) + enc_params["b1"])
    ml = h1 @ enc_params["Wml"].astype(jnp.float32) + enc_params["bml"]
    mu, lv = ml[:, :latent], ml[:, latent:]
    z = mu + jnp.exp(0.5 * lv) * eps
    h2 = jax.nn.relu(z @ dec_params["W2"].astype(jnp.float32) + dec_params["b2"])
    x_hat = jax.nn.sigmoid(h2 @ dec_params["W3"].astype(jnp.float32) + dec_params["b3"])
    return {"z": z, "mu": mu, "log_var": lv,
            "x_hat": x_hat.reshape(B, C, H, W)}


# ---------------------------------- Main -------------------------------------

if __name__ == "__main__":
    key = jax.random.PRNGKey(0)
    k_x, k_p, k_eps = jax.random.split(key, 3)

    B, C, H, W = 2, 4, 16, 16
    D = C * H * W          # 1024
    HIDDEN = 256
    LATENT = 128

    x = jax.random.normal(k_x, (B, C, H, W), jnp.float32)
    enc_params, dec_params = init_params(k_p, D, HIDDEN, LATENT)
    eps = jax.random.normal(k_eps, (B, LATENT), jnp.float32)

    out = jax.jit(vae_forward)(x, enc_params, dec_params, eps)
    jax.block_until_ready(out)

    # shape / finiteness sanity checks
    assert out["z"].shape == (B, LATENT)
    assert out["mu"].shape == (B, LATENT)
    assert out["log_var"].shape == (B, LATENT)
    assert out["x_hat"].shape == (B, C, H, W)
    assert bool(jnp.all(jnp.isfinite(out["x_hat"])))

    # numeric check vs pure-JAX reference (loose tol: bf16 MXU operands)
    ref = vae_reference(x, enc_params, dec_params, eps)
    for name in ("mu", "log_var", "z", "x_hat"):
        assert bool(jnp.allclose(out[name], ref[name], atol=5e-2, rtol=5e-2)), name

    print("KERNEL_OK")
</pallas_src>

<mosaic_0001>
module attributes {stable_mosaic.version = 11 : i64} {
  func.func @vae_fused_kernel(%arg0: i32, %arg1: memref<8x1024xf32, #tpu.memory_space<vmem>>, %arg2: memref<1024x256xbf16, #tpu.memory_space<vmem>>, %arg3: memref<1x256xf32, #tpu.memory_space<vmem>>, %arg4: memref<256x256xbf16, #tpu.memory_space<vmem>>, %arg5: memref<1x256xf32, #tpu.memory_space<vmem>>, %arg6: memref<128x256xbf16, #tpu.memory_space<vmem>>, %arg7: memref<1x256xf32, #tpu.memory_space<vmem>>, %arg8: memref<256x1024xbf16, #tpu.memory_space<vmem>>, %arg9: memref<1x1024xf32, #tpu.memory_space<vmem>>, %arg10: memref<8x128xf32, #tpu.memory_space<vmem>>, %arg11: memref<8x128xf32, #tpu.memory_space<vmem>>, %arg12: memref<8x128xf32, #tpu.memory_space<vmem>>, %arg13: memref<8x128xf32, #tpu.memory_space<vmem>>, %arg14: memref<8x1024xf32, #tpu.memory_space<vmem>>) attributes {dimension_semantics = [#tpu.dimension_semantics<parallel>], iteration_bounds = array<i64: 1>, scalar_prefetch = 0 : i64, scratch_operands = 0 : i64, tpu.core_type = #tpu.core_type<tc>, window_params = [{transform_indices = @transform_0, window_bounds = array<i64: 8, 1024>}, {pipeline_mode = #tpu.pipeline_mode<synchronous>, transform_indices = @transform_1, window_bounds = array<i64: 1024, 256>}, {pipeline_mode = #tpu.pipeline_mode<synchronous>, transform_indices = @transform_2, window_bounds = array<i64: 1, 256>}, {pipeline_mode = #tpu.pipeline_mode<synchronous>, transform_indices = @transform_3, window_bounds = array<i64: 256, 256>}, {pipeline_mode = #tpu.pipeline_mode<synchronous>, transform_indices = @transform_4, window_bounds = array<i64: 1, 256>}, {pipeline_mode = #tpu.pipeline_mode<synchronous>, transform_indices = @transform_5, window_bounds = array<i64: 128, 256>}, {pipeline_mode = #tpu.pipeline_mode<synchronous>, transform_indices = @transform_6, window_bounds = array<i64: 1, 256>}, {pipeline_mode = #tpu.pipeline_mode<synchronous>, transform_indices = @transform_7, window_bounds = array<i64: 256, 1024>}, {pipeline_mode = #tpu.pipeline_mode<synchronous>, transform_indices = @transform_8, window_bounds = array<i64: 1, 1024>}, {transform_indices = @transform_9, window_bounds = array<i64: 8, 128>}, {transform_indices = @transform_10, window_bounds = array<i64: 8, 128>}, {transform_indices = @transform_11, window_bounds = array<i64: 8, 128>}, {transform_indices = @transform_12, window_bounds = array<i64: 8, 128>}, {transform_indices = @transform_13, window_bounds = array<i64: 8, 1024>}]} {
    %c0 = arith.constant 0 : index
    %c0_0 = arith.constant 0 : index
    %0 = vector.load %arg1[%c0, %c0_0] : memref<8x1024xf32, #tpu.memory_space<vmem>>, vector<8x1024xf32>
    %1 = arith.truncf %0 : vector<8x1024xf32> to vector<8x1024xbf16>
    %c0_1 = arith.constant 0 : index
    %c0_2 = arith.constant 0 : index
    %2 = vector.load %arg2[%c0_1, %c0_2] : memref<1024x256xbf16, #tpu.memory_space<vmem>>, vector<1024x256xbf16>
    %cst = arith.constant dense<0.000000e+00> : vector<8x256xf32>
    %3 = tpu.matmul %1, %2, %cst {dimension_numbers = #tpu.dot_dimension_numbers<[1], [0], [0], [1], [0, 0, 1, 1], [], []>} : vector<8x1024xbf16>, vector<1024x256xbf16>, vector<8x256xf32> -> vector<8x256xf32>
    %c0_3 = arith.constant 0 : index
    %c0_4 = arith.constant 0 : index
    %4 = vector.load %arg3[%c0_3, %c0_4] : memref<1x256xf32, #tpu.memory_space<vmem>>, vector<1x256xf32>
    %5 = vector.broadcast %4 : vector<1x256xf32> to vector<8x256xf32>
    %6 = arith.addf %3, %5 : vector<8x256xf32>
    %cst_5 = arith.constant 0.000000e+00 : f32
    %7 = vector.broadcast %cst_5 : f32 to vector<8x256xf32>
    %8 = arith.maximumf %6, %7 : vector<8x256xf32>
    %9 = arith.truncf %8 : vector<8x256xf32> to vector<8x256xbf16>
    %c0_6 = arith.constant 0 : index
    %c0_7 = arith.constant 0 : index
    %10 = vector.load %arg4[%c0_6, %c0_7] : memref<256x256xbf16, #tpu.memory_space<vmem>>, vector<256x256xbf16>
    %cst_8 = arith.constant dense<0.000000e+00> : vector<8x256xf32>
    %11 = tpu.matmul %9, %10, %cst_8 {dimension_numbers = #tpu.dot_dimension_numbers<[1], [0], [0], [1], [0, 0, 1, 1], [], []>} : vector<8x256xbf16>, vector<256x256xbf16>, vector<8x256xf32> -> vector<8x256xf32>
    %c0_9 = arith.constant 0 : index
    %c0_10 = arith.constant 0 : index
    %12 = vector.load %arg5[%c0_9, %c0_10] : memref<1x256xf32, #tpu.memory_space<vmem>>, vector<1x256xf32>
    %13 = vector.broadcast %12 : vector<1x256xf32> to vector<8x256xf32>
    %14 = arith.addf %11, %13 : vector<8x256xf32>
    %15 = vector.extract_strided_slice %14 {offsets = [0, 0], sizes = [8, 128], strides = [1, 1]} : vector<8x256xf32> to vector<8x128xf32>
    %16 = vector.extract_strided_slice %14 {offsets = [0, 128], sizes = [8, 128], strides = [1, 1]} : vector<8x256xf32> to vector<8x128xf32>
    %c0_11 = arith.constant 0 : index
    %c0_12 = arith.constant 0 : index
    %17 = vector.load %arg11[%c0_11, %c0_12] : memref<8x128xf32, #tpu.memory_space<vmem>>, vector<8x128xf32>
    tpu.vector_store %arg11[%c0_11, %c0_12], %15 {strides = array<i32>} : memref<8x128xf32, #tpu.memory_space<vmem>>, vector<8x128xf32>,
    %c0_13 = arith.constant 0 : index
    %c0_14 = arith.constant 0 : index
    %18 = vector.load %arg12[%c0_13, %c0_14] : memref<8x128xf32, #tpu.memory_space<vmem>>, vector<8x128xf32>
    tpu.vector_store %arg12[%c0_13, %c0_14], %16 {strides = array<i32>} : memref<8x128xf32, #tpu.memory_space<vmem>>, vector<8x128xf32>,
    %cst_15 = arith.constant 5.000000e-01 : f32
    %19 = vector.broadcast %cst_15 : f32 to vector<8x128xf32>
    %20 = arith.mulf %19, %16 : vector<8x128xf32>
    %21 = math.exp %20 : vector<8x128xf32>
    %c0_16 = arith.constant 0 : index
    %c0_17 = arith.constant 0 : index
    %22 = vector.load %arg10[%c0_16, %c0_17] : memref<8x128xf32, #tpu.memory_space<vmem>>, vector<8x128xf32>
    %23 = arith.mulf %21, %22 : vector<8x128xf32>
    %24 = arith.addf %15, %23 : vector<8x128xf32>
    %c0_18 = arith.constant 0 : index
    %c0_19 = arith.constant 0 : index
    %25 = vector.load %arg13[%c0_18, %c0_19] : memref<8x128xf32, #tpu.memory_space<vmem>>, vector<8x128xf32>
    tpu.vector_store %arg13[%c0_18, %c0_19], %24 {strides = array<i32>} : memref<8x128xf32, #tpu.memory_space<vmem>>, vector<8x128xf32>,
    %26 = arith.truncf %24 : vector<8x128xf32> to vector<8x128xbf16>
    %c0_20 = arith.constant 0 : index
    %c0_21 = arith.constant 0 : index
    %27 = vector.load %arg6[%c0_20, %c0_21] : memref<128x256xbf16, #tpu.memory_space<vmem>>, vector<128x256xbf16>
    %cst_22 = arith.constant dense<0.000000e+00> : vector<8x256xf32>
    %28 = tpu.matmul %26, %27, %cst_22 {dimension_numbers = #tpu.dot_dimension_numbers<[1], [0], [0], [1], [0, 0, 1, 1], [], []>} : vector<8x128xbf16>, vector<128x256xbf16>, vector<8x256xf32> -> vector<8x256xf32>
    %c0_23 = arith.constant 0 : index
    %c0_24 = arith.constant 0 : index
    %29 = vector.load %arg7[%c0_23, %c0_24] : memref<1x256xf32, #tpu.memory_space<vmem>>, vector<1x256xf32>
    %30 = vector.broadcast %29 : vector<1x256xf32> to vector<8x256xf32>
    %31 = arith.addf %28, %30 : vector<8x256xf32>
    %cst_25 = arith.constant 0.000000e+00 : f32
    %32 = vector.broadcast %cst_25 : f32 to vector<8x256xf32>
    %33 = arith.maximumf %31, %32 : vector<8x256xf32>
    %34 = arith.truncf %33 : vector<8x256xf32> to vector<8x256xbf16>
    %c0_26 = arith.constant 0 : index
    %c0_27 = arith.constant 0 : index
    %35 = vector.load %arg8[%c0_26, %c0_27] : memref<256x1024xbf16, #tpu.memory_space<vmem>>, vector<256x1024xbf16>
    %cst_28 = arith.constant dense<0.000000e+00> : vector<8x1024xf32>
    %36 = tpu.matmul %34, %35, %cst_28 {dimension_numbers = #tpu.dot_dimension_numbers<[1], [0], [0], [1], [0, 0, 1, 1], [], []>} : vector<8x256xbf16>, vector<256x1024xbf16>, vector<8x1024xf32> -> vector<8x1024xf32>
    %c0_29 = arith.constant 0 : index
    %c0_30 = arith.constant 0 : index
    %37 = vector.load %arg9[%c0_29, %c0_30] : memref<1x1024xf32, #tpu.memory_space<vmem>>, vector<1x1024xf32>
    %38 = vector.broadcast %37 : vector<1x1024xf32> to vector<8x1024xf32>
    %39 = arith.addf %36, %38 : vector<8x1024xf32>
    %40 = arith.negf %39 : vector<8x1024xf32>
    %41 = math.exp %40 : vector<8x1024xf32>
    %cst_31 = arith.constant 1.000000e+00 : f32
    %42 = vector.broadcast %cst_31 : f32 to vector<8x1024xf32>
    %43 = arith.addf %42, %41 : vector<8x1024xf32>
    %44 = arith.divf %42, %43 : vector<8x1024xf32>
    %c0_32 = arith.constant 0 : index
    %c0_33 = arith.constant 0 : index
    %45 = vector.load %arg14[%c0_32, %c0_33] : memref<8x1024xf32, #tpu.memory_space<vmem>>, vector<8x1024xf32>
    tpu.vector_store %arg14[%c0_32, %c0_33], %44 {strides = array<i32>} : memref<8x1024xf32, #tpu.memory_space<vmem>>, vector<8x1024xf32>,
    return
  }
  func.func @transform_0(%arg0: i32) -> (i32, i32) {
    %c0_i32 = arith.constant 0 : i32
    %c0_i32_0 = arith.constant 0 : i32
    return %arg0, %c0_i32 : i32, i32
  }
  func.func @transform_1(%arg0: i32) -> (i32, i32) {
    %c0_i32 = arith.constant 0 : i32
    %c0_i32_0 = arith.constant 0 : i32
    %c0_i32_1 = arith.constant 0 : i32
    return %c0_i32, %c0_i32_0 : i32, i32
  }
  func.func @transform_2(%arg0: i32) -> (i32, i32) {
    %c0_i32 = arith.constant 0 : i32
    %c0_i32_0 = arith.constant 0 : i32
    %c0_i32_1 = arith.constant 0 : i32
    return %c0_i32, %c0_i32_0 : i32, i32
  }
  func.func @transform_3(%arg0: i32) -> (i32, i32) {
    %c0_i32 = arith.constant 0 : i32
    %c0_i32_0 = arith.constant 0 : i32
    %c0_i32_1 = arith.constant 0 : i32
    return %c0_i32, %c0_i32_0 : i32, i32
  }
  func.func @transform_4(%arg0: i32) -> (i32, i32) {
    %c0_i32 = arith.constant 0 : i32
    %c0_i32_0 = arith.constant 0 : i32
    %c0_i32_1 = arith.constant 0 : i32
    return %c0_i32, %c0_i32_0 : i32, i32
  }
  func.func @transform_5(%arg0: i32) -> (i32, i32) {
    %c0_i32 = arith.constant 0 : i32
    %c0_i32_0 = arith.constant 0 : i32
    %c0_i32_1 = arith.constant 0 : i32
    return %c0_i32, %c0_i32_0 : i32, i32
  }
  func.func @transform_6(%arg0: i32) -> (i32, i32) {
    %c0_i32 = arith.constant 0 : i32
    %c0_i32_0 = arith.constant 0 : i32
    %c0_i32_1 = arith.constant 0 : i32
    return %c0_i32, %c0_i32_0 : i32, i32
  }
  func.func @transform_7(%arg0: i32) -> (i32, i32) {
    %c0_i32 = arith.constant 0 : i32
    %c0_i32_0 = arith.constant 0 : i32
    %c0_i32_1 = arith.constant 0 : i32
    return %c0_i32, %c0_i32_0 : i32, i32
  }
  func.func @transform_8(%arg0: i32) -> (i32, i32) {
    %c0_i32 = arith.constant 0 : i32
    %c0_i32_0 = arith.constant 0 : i32
    %c0_i32_1 = arith.constant 0 : i32
    return %c0_i32, %c0_i32_0 : i32, i32
  }
  func.func @transform_9(%arg0: i32) -> (i32, i32) {
    %c0_i32 = arith.constant 0 : i32
    %c0_i32_0 = arith.constant 0 : i32
    return %arg0, %c0_i32 : i32, i32
  }
  func.func @transform_10(%arg0: i32) -> (i32, i32) {
    %c0_i32 = arith.constant 0 : i32
    %c0_i32_0 = arith.constant 0 : i32
    return %arg0, %c0_i32 : i32, i32
  }
  func.func @transform_11(%arg0: i32) -> (i32, i32) {
    %c0_i32 = arith.constant 0 : i32
    %c0_i32_0 = arith.constant 0 : i32
    return %arg0, %c0_i32 : i32, i32
  }
  func.func @transform_12(%arg0: i32) -> (i32, i32) {
    %c0_i32 = arith.constant 0 : i32
    %c0_i32_0 = arith.constant 0 : i32
    return %arg0, %c0_i32 : i32, i32
  }
  func.func @transform_13(%arg0: i32) -> (i32, i32) {
    %c0_i32 = arith.constant 0 : i32
    %c0_i32_0 = arith.constant 0 : i32
    return %arg0, %c0_i32 : i32, i32
  }
}

</mosaic_0001>

<llo_original>
// kernel: vae_forward.1
$region0: #{vae_forward.1}
  #allocation0 [shape = 'u32[]', space=smem, size = 0x4, offset = 0x4, fixed_abs, tag = 'smem constant byte address 0x4 - core index']
  #allocation1 [shape = 'u32[144,128]{1,0:T(1,128)}', space=vmem, size = 0x12000, scoped, tag = 'internal scratch']
  %s0 = inlined_call_operand.vmem [shape: f32[8,1024], index: 0, kind: input, shape index: {}]
  %s1 = inlined_call_operand.hbm [shape: bf16[1024,256], index: 1, kind: input, shape index: {}]
  %s2 = inlined_call_operand.vmem [shape: f32[1,256], index: 2, kind: input, shape index: {}]
  %s3 = inlined_call_operand.hbm [shape: bf16[256,256], index: 3, kind: input, shape index: {}]
  %s4 = inlined_call_operand.vmem [shape: f32[1,256], index: 4, kind: input, shape index: {}]
  %s5 = inlined_call_operand.vmem [shape: bf16[128,256], index: 5, kind: input, shape index: {}]
  %s6 = inlined_call_operand.vmem [shape: f32[1,256], index: 6, kind: input, shape index: {}]
  %s7 = inlined_call_operand.hbm [shape: bf16[256,1024], index: 7, kind: input, shape index: {}]
  %s8 = inlined_call_operand.vmem [shape: f32[1,1024], index: 8, kind: input, shape index: {}]
  %s9 = inlined_call_operand.vmem [shape: f32[8,128], index: 9, kind: input, shape index: {}]
  %s10 = inlined_call_operand.vmem [shape: f32[8,128], index: 10, kind: output, shape index: {0}]
  %s11 = inlined_call_operand.vmem [shape: f32[8,128], index: 11, kind: output, shape index: {1}]
  %s12 = inlined_call_operand.vmem [shape: f32[8,128], index: 12, kind: output, shape index: {2}]
  %s13 = inlined_call_operand.vmem [shape: f32[8,1024], index: 13, kind: output, shape index: {3}]
  %14 = xla_tuple %s10, %s11, %s12, %s13
  %s15 = sld [smem:[#allocation0]]
  $region86: #{vae_forward.1} parent=0
    _
  %s17 = ssub.s32 1, %s15
  %s18 = scalar_select 0, %s17, %s15
  $region1: #{vae_forward.1} parent=0
    #allocation2 [shape = 'u8[524288]{0}', space=vmem, size = 0x80000, scoped, tag = 'input window, operand 1, single buffered']
    #allocation3 [shape = 's32[1]{0}', space=sflag, size = 0x4, scoped, tag = 'scoped memory for vae_forward.1']
    #allocation4 [shape = 'u8[131072]{0}', space=vmem, size = 0x20000, scoped, tag = 'input window, operand 3, single buffered']
    #allocation5 [shape = 's32[1]{0}', space=sflag, size = 0x4, scoped, tag = 'scoped memory for vae_forward.1']
    #allocation6 [shape = 'u8[524288]{0}', space=vmem, size = 0x80000, scoped, tag = 'input window, operand 7, single buffered']
    %19 = vsyncpa [#allocation3], 0
    %20 = vsyncpa [#allocation5], 0
    // Predicated region
    $region2: #{vae_forward.1} parent=1 // pred_check
      _
    $region3: #{vae_forward.1} parent=1 // pred_check_branch
      %22 = sbr.rel (0) target = $region5
    $region4: #{vae_forward.1} parent=1 // pred_region
      _
    $region5: #{vae_forward.1} parent=1 // pred_fallthru
      _
    // Predicated region
    $region6: #{vae_forward.1} parent=1 // pred_check
      _
    $region7: #{vae_forward.1} parent=1 // pred_check_branch
      %24 = sbr.rel (0) target = $region9
    $region8: #{vae_forward.1} parent=1 // pred_region
      %s26 = ssub.s32 16384, 16384
      %27 = vsyncadd [#allocation3], %s26
      %s28 = sshll.u32 [#allocation2], 4
      %s29 = int_to_ptr.vmem [resolvable:$true] %s28
      %34 = dma.hbm_to_vmem [thread:$0]  %s1, 16384, %s29, [#allocation3], 128, 128, 8
    $region9: #{vae_forward.1} parent=1 // pred_fallthru
      _
    // Predicated region
    $region10: #{vae_forward.1} parent=1 // pred_check
      _
    $region11: #{vae_forward.1} parent=1 // pred_check_branch
      %36 = sbr.rel (0) target = $region13
    $region12: #{vae_forward.1} parent=1 // pred_region
      _
    $region13: #{vae_forward.1} parent=1 // pred_fallthru
      _
    // Predicated region
    $region14: #{vae_forward.1} parent=1 // pred_check
      _
    $region15: #{vae_forward.1} parent=1 // pred_check_branch
      %38 = sbr.rel (0) target = $region17
    $region16: #{vae_forward.1} parent=1 // pred_region
      %s40 = ssub.s32 4096, 4096
      %41 = vsyncadd [#allocation5], %s40
      %s42 = sshll.u32 [#allocation4], 4
      %s43 = int_to_ptr.vmem [resolvable:$true] %s42
      %48 = dma.hbm_to_vmem [thread:$0]  %s3, 4096, %s43, [#allocation5], 128, 128, 8
    $region17: #{vae_forward.1} parent=1 // pred_fallthru
      _
    // Predicated region
    $region18: #{vae_forward.1} parent=1 // pred_check
      _
    $region19: #{vae_forward.1} parent=1 // pred_check_branch
      %50 = sbr.rel (0) target = $region21
    $region20: #{vae_forward.1} parent=1 // pred_region
      _
    $region21: #{vae_forward.1} parent=1 // pred_fallthru
      _
    // Predicated region
    $region22: #{vae_forward.1} parent=1 // pred_check
      _
    $region23: #{vae_forward.1} parent=1 // pred_check_branch
      %52 = sbr.rel (0) target = $region25
    $region24: #{vae_forward.1} parent=1 // pred_region
      _
    $region25: #{vae_forward.1} parent=1 // pred_fallthru
      _
    // Predicated region
    $region26: #{vae_forward.1} parent=1 // pred_check
      _
    $region27: #{vae_forward.1} parent=1 // pred_check_branch
      %54 = sbr.rel (0) target = $region29
    $region28: #{vae_forward.1} parent=1 // pred_region
      _
    $region29: #{vae_forward.1} parent=1 // pred_fallthru
      _
    // Predicated region
    $region30: #{vae_forward.1} parent=1 // pred_check
      _
    $region31: #{vae_forward.1} parent=1 // pred_check_branch
      %56 = sbr.rel (0) target = $region33
    $region32: #{vae_forward.1} parent=1 // pred_region
      %s58 = ssub.s32 16384, 16384
      %59 = vsyncadd [#allocation5], %s58
      %s60 = sshll.u32 [#allocation6], 4
      %s61 = int_to_ptr.vmem [resolvable:$true] %s60
      %66 = dma.hbm_to_vmem [thread:$0]  %s7, 16384, %s61, [#allocation5], 512, 512, 32
    $region33: #{vae_forward.1} parent=1 // pred_fallthru
      _
    // Predicated region
    $region34: #{vae_forward.1} parent=1 // pred_check
      _
    $region35: #{vae_forward.1} parent=1 // pred_check_branch
      %68 = sbr.rel (0) target = $region37
    $region36: #{vae_forward.1} parent=1 // pred_region
      _
    $region37: #{vae_forward.1} parent=1 // pred_fallthru
      _
    // Predicated region
    $region38: #{vae_forward.1} parent=1 // pred_check
      _
    $region39: #{vae_forward.1} parent=1 // pred_check_branch
      %70 = sbr.rel (0) target = $region41
    $region40: #{vae_forward.1} parent=1 // pred_region
      _
    $region41: #{vae_forward.1} parent=1 // pred_fallthru
      _
    // Predicated region
    $region42: #{vae_forward.1} parent=1 // pred_check
      _
    $region43: #{vae_forward.1} parent=1 // pred_check_branch
      %72 = sbr.rel (0) target = $region45
    $region44: #{vae_forward.1} parent=1 // pred_region
      %73 = dma.done [#allocation3], 16384
    $region45: #{vae_forward.1} parent=1 // pred_fallthru
      _
    // Predicated region
    $region46: #{vae_forward.1} parent=1 // pred_check
      _
    $region47: #{vae_forward.1} parent=1 // pred_check_branch
      %75 = sbr.rel (0) target = $region49
    $region48: #{vae_forward.1} parent=1 // pred_region
      %76 = dma.done [#allocation5], 4096
    $region49: #{vae_forward.1} parent=1 // pred_fallthru
      _
    // Predicated region
    $region50: #{vae_forward.1} parent=1 // pred_check
      _
    $region51: #{vae_forward.1} parent=1 // pred_check_branch
      %78 = sbr.rel (0) target = $region53
    $region52: #{vae_forward.1} parent=1 // pred_region
      %79 = dma.done [#allocation5], 16384
    $region53: #{vae_forward.1} parent=1 // pred_fallthru
      _
    %v81 = vld [vmem:[%s0] sm:$0xff]
    %v82 = vld [vmem:[%s0 + $0x8] sm:$0xff]
    %v83 = vld [vmem:[%s0 + $0x10] sm:$0xff]
    %v84 = vld [vmem:[%s0 + $0x18] sm:$0xff]
    %v85 = vld [vmem:[%s0 + $0x20] sm:$0xff]
    %v86 = vld [vmem:[%s0 + $0x28] sm:$0xff]
    %v87 = vld [vmem:[%s0 + $0x30] sm:$0xff]
    %v88 = vld [vmem:[%s0 + $0x38] sm:$0xff]
    %v89 = vpack.c.bf16 %v81, %v81
    %v90 = vpack.c.bf16 %v82, %v82
    %v91 = vpack.c.bf16 %v83, %v83
    %v92 = vpack.c.bf16 %v84, %v84
    %v93 = vpack.c.bf16 %v85, %v85
    %v94 = vpack.c.bf16 %v86, %v86
    %v95 = vpack.c.bf16 %v87, %v87
    %v96 = vpack.c.bf16 %v88, %v88
    %v97 = vld [vmem:[#allocation2] sm:$0xff]
    %v98 = vld [vmem:[#allocation2 + $0x8] sm:$0xff]
    %v99 = vld [vmem:[#allocation2 + $0x10] sm:$0xff]
    %v100 = vld [vmem:[#allocation2 + $0x18] sm:$0xff]
    %v101 = vld [vmem:[#allocation2 + $0x20] sm:$0xff]
    %v102 = vld [vmem:[#allocation2 + $0x28] sm:$0xff]
    %v103 = vld [vmem:[#allocation2 + $0x30] sm:$0xff]
    %v104 = vld [vmem:[#allocation2 + $0x38] sm:$0xff]
    %v105 = vld [vmem:[#allocation2 + $0x40] sm:$0xff]
    %v106 = vld [vmem:[#allocation2 + $0x48] sm:$0xff]
    %v107 = vld [vmem:[#allocation2 + $0x50] sm:$0xff]
    %v108 = vld [vmem:[#allocation2 + $0x58] sm:$0xff]
    %v109 = vld [vmem:[#allocation2 + $0x60] sm:$0xff]
    %v110 = vld [vmem:[#allocation2 + $0x68] sm:$0xff]
    %v111 = vld [vmem:[#allocation2 + $0x70] sm:$0xff]
    %v112 = vld [vmem:[#allocation2 + $0x78] sm:$0xff]
    %v113 = vld [vmem:[#allocation2 + $0x80] sm:$0xff]
    %v114 = vld [vmem:[#allocation2 + $0x88] sm:$0xff]
    %v115 = vld [vmem:[#allocation2 + $0x90] sm:$0xff]
    %v116 = vld [vmem:[#allocation2 + $0x98] sm:$0xff]
    %v117 = vld [vmem:[#allocation2 + $0xa0] sm:$0xff]
    %v118 = vld [vmem:[#allocation2 + $0xa8] sm:$0xff]
    %v119 = vld [vmem:[#allocation2 + $0xb0] sm:$0xff]
    %v120 = vld [vmem:[#allocation2 + $0xb8] sm:$0xff]
    %v121 = vld [vmem:[#allocation2 + $0xc0] sm:$0xff]
    %v122 = vld [vmem:[#allocation2 + $0xc8] sm:$0xff]
    %v123 = vld [vmem:[#allocation2 + $0xd0] sm:$0xff]
    %v124 = vld [vmem:[#allocation2 + $0xd8] sm:$0xff]
    %v125 = vld [vmem:[#allocation2 + $0xe0] sm:$0xff]
    %v126 = vld [vmem:[#allocation2 + $0xe8] sm:$0xff]
    %v127 = vld [vmem:[#allocation2 + $0xf0] sm:$0xff]
    %v128 = vld [vmem:[#allocation2 + $0xf8] sm:$0xff]
    %v129 = vld [vmem:[#allocation2 + $0x100] sm:$0xff]
    %v130 = vld [vmem:[#allocation2 + $0x108] sm:$0xff]
    %v131 = vld [vmem:[#allocation2 + $0x110] sm:$0xff]
    %v132 = vld [vmem:[#allocation2 + $0x118] sm:$0xff]
    %v133 = vld [vmem:[#allocation2 + $0x120] sm:$0xff]
    %v134 = vld [vmem:[#allocation2 + $0x128] sm:$0xff]
    %v135 = vld [vmem:[#allocation2 + $0x130] sm:$0xff]
    %v136 = vld [vmem:[#allocation2 + $0x138] sm:$0xff]
    %v137 = vld [vmem:[#allocation2 + $0x140] sm:$0xff]
    %v138 = vld [vmem:[#allocation2 + $0x148] sm:$0xff]
    %v139 = vld [vmem:[#allocation2 + $0x150] sm:$0xff]
    %v140 = vld [vmem:[#allocation2 + $0x158] sm:$0xff]
    %v141 = vld [vmem:[#allocation2 + $0x160] sm:$0xff]
    %v142 = vld [vmem:[#allocation2 + $0x168] sm:$0xff]
    %v143 = vld [vmem:[#allocation2 + $0x170] sm:$0xff]
    %v144 = vld [vmem:[#allocation2 + $0x178] sm:$0xff]
    %v145 = vld [vmem:[#allocation2 + $0x180] sm:$0xff]
    %v146 = vld [vmem:[#allocation2 + $0x188] sm:$0xff]
    %v147 = vld [vmem:[#allocation2 + $0x190] sm:$0xff]
    %v148 = vld [vmem:[#allocation2 + $0x198] sm:$0xff]
    %v149 = vld [vmem:[#allocation2 + $0x1a0] sm:$0xff]
    %v150 = vld [vmem:[#allocation2 + $0x1a8] sm:$0xff]
    %v151 = vld [vmem:[#allocation2 + $0x1b0] sm:$0xff]
    %v152 = vld [vmem:[#allocation2 + $0x1b8] sm:$0xff]
    %v153 = vld [vmem:[#allocation2 + $0x1c0] sm:$0xff]
    %v154 = vld [vmem:[#allocation2 + $0x1c8] sm:$0xff]
    %v155 = vld [vmem:[#allocation2 + $0x1d0] sm:$0xff]
    %v156 = vld [vmem:[#allocation2 + $0x1d8] sm:$0xff]
    %v157 = vld [vmem:[#allocation2 + $0x1e0] sm:$0xff]
    %v158 = vld [vmem:[#allocation2 + $0x1e8] sm:$0xff]
    %v159 = vld [vmem:[#allocation2 + $0x1f0] sm:$0xff]
    %v160 = vld [vmem:[#allocation2 + $0x1f8] sm:$0xff]
    %v161 = vld [vmem:[#allocation2 + $0x200] sm:$0xff]
    %v162 = vld [vmem:[#allocation2 + $0x208] sm:$0xff]
    %v163 = vld [vmem:[#allocation2 + $0x210] sm:$0xff]
    %v164 = vld [vmem:[#allocation2 + $0x218] sm:$0xff]
    %v165 = vld [vmem:[#allocation2 + $0x220] sm:$0xff]
    %v166 = vld [vmem:[#allocation2 + $0x228] sm:$0xff]
    %v167 = vld [vmem:[#allocation2 + $0x230] sm:$0xff]
    %v168 = vld [vmem:[#allocation2 + $0x238] sm:$0xff]
    %v169 = vld [vmem:[#allocation2 + $0x240] sm:$0xff]
    %v170 = vld [vmem:[#allocation2 + $0x248] sm:$0xff]
    %v171 = vld [vmem:[#allocation2 + $0x250] sm:$0xff]
    %v172 = vld [vmem:[#allocation2 + $0x258] sm:$0xff]
    %v173 = vld [vmem:[#allocation2 + $0x260] sm:$0xff]
    %v174 = vld [vmem:[#allocation2 + $0x268] sm:$0xff]
    %v175 = vld [vmem:[#allocation2 + $0x270] sm:$0xff]
    %v176 = vld [vmem:[#allocation2 + $0x278] sm:$0xff]
    %v177 = vld [vmem:[#allocation2 + $0x280] sm:$0xff]
    %v178 = vld [vmem:[#allocation2 + $0x288] sm:$0xff]
    %v179 = vld [vmem:[#allocation2 + $0x290] sm:$0xff]
    %v180 = vld [vmem:[#allocation2 + $0x298] sm:$0xff]
    %v181 = vld [vmem:[#allocation2 + $0x2a0] sm:$0xff]
    %v182 = vld [vmem:[#allocation2 + $0x2a8] sm:$0xff]
    %v183 = vld [vmem:[#allocation2 + $0x2b0] sm:$0xff]
    %v184 = vld [vmem:[#allocation2 + $0x2b8] sm:$0xff]
    %v185 = vld [vmem:[#allocation2 + $0x2c0] sm:$0xff]
    %v186 = vld [vmem:[#allocation2 + $0x2c8] sm:$0xff]
    %v187 = vld [vmem:[#allocation2 + $0x2d0] sm:$0xff]
    %v188 = vld [vmem:[#allocation2 + $0x2d8] sm:$0xff]
    %v189 = vld [vmem:[#allocation2 + $0x2e0] sm:$0xff]
    %v190 = vld [vmem:[#allocation2 + $0x2e8] sm:$0xff]
    %v191 = vld [vmem:[#allocation2 + $0x2f0] sm:$0xff]
    %v192 = vld [vmem:[#allocation2 + $0x2f8] sm:$0xff]
    %v193 = vld [vmem:[#allocation2 + $0x300] sm:$0xff]
    %v194 = vld [vmem:[#allocation2 + $0x308] sm:$0xff]
    %v195 = vld [vmem:[#allocation2 + $0x310] sm:$0xff]
    %v196 = vld [vmem:[#allocation2 + $0x318] sm:$0xff]
    %v197 = vld [vmem:[#allocation2 + $0x320] sm:$0xff]
    %v198 = vld [vmem:[#allocation2 + $0x328] sm:$0xff]
    %v199 = vld [vmem:[#allocation2 + $0x330] sm:$0xff]
    %v200 = vld [vmem:[#allocation2 + $0x338] sm:$0xff]
    %v201 = vld [vmem:[#allocation2 + $0x340] sm:$0xff]
    %v202 = vld [vmem:[#allocation2 + $0x348] sm:$0xff]
    %v203 = vld [vmem:[#allocation2 + $0x350] sm:$0xff]
    %v204 = vld [vmem:[#allocation2 + $0x358] sm:$0xff]
    %v205 = vld [vmem:[#allocation2 + $0x360] sm:$0xff]
    %v206 = vld [vmem:[#allocation2 + $0x368] sm:$0xff]
    %v207 = vld [vmem:[#allocation2 + $0x370] sm:$0xff]
    %v208 = vld [vmem:[#allocation2 + $0x378] sm:$0xff]
    %v209 = vld [vmem:[#allocation2 + $0x380] sm:$0xff]
    %v210 = vld [vmem:[#allocation2 + $0x388] sm:$0xff]
    %v211 = vld [vmem:[#allocation2 + $0x390] sm:$0xff]
    %v212 = vld [vmem:[#allocation2 + $0x398] sm:$0xff]
    %v213 = vld [vmem:[#allocation2 + $0x3a0] sm:$0xff]
    %v214 = vld [vmem:[#allocation2 + $0x3a8] sm:$0xff]
    %v215 = vld [vmem:[#allocation2 + $0x3b0] sm:$0xff]
    %v216 = vld [vmem:[#allocation2 + $0x3b8] sm:$0xff]
    %v217 = vld [vmem:[#allocation2 + $0x3c0] sm:$0xff]
    %v218 = vld [vmem:[#allocation2 + $0x3c8] sm:$0xff]
    %v219 = vld [vmem:[#allocation2 + $0x3d0] sm:$0xff]
    %v220 = vld [vmem:[#allocation2 + $0x3d8] sm:$0xff]
    %v221 = vld [vmem:[#allocation2 + $0x3e0] sm:$0xff]
    %v222 = vld [vmem:[#allocation2 + $0x3e8] sm:$0xff]
    %v223 = vld [vmem:[#allocation2 + $0x3f0] sm:$0xff]
    %v224 = vld [vmem:[#allocation2 + $0x3f8] sm:$0xff]
    %v225 = vld [vmem:[%s2] sm:$0x3]
    %v227 = vlaneseq
    %v228 = vshrl.u32 %v227, 7
    %v229 = vsub.s32 0, %v228
    %v230 = vrot.slane %v225, %v229
    %v231 = vlaneseq
    %v232 = vshrl.u32 %v231, 7
    %v233 = vsub.s32 1, %v232
    %v234 = vrot.slane %v225, %v233
    %v365 = vunpack.c.l.b16 %v97
    %v366 = vunpack.c.h.b16 %v97
    %v367 = vunpack.c.l.b16 %v98
    %v368 = vunpack.c.h.b16 %v98
    %v369 = vunpack.c.l.b16 %v99
    %v370 = vunpack.c.h.b16 %v99
    %v371 = vunpack.c.l.b16 %v100
    %v372 = vunpack.c.h.b16 %v100
    %v373 = vunpack.c.l.b16 %v101
    %v374 = vunpack.c.h.b16 %v101
    %v375 = vunpack.c.l.b16 %v102
    %v376 = vunpack.c.h.b16 %v102
    %v377 = vunpack.c.l.b16 %v103
    %v378 = vunpack.c.h.b16 %v103
    %v379 = vunpack.c.l.b16 %v104
    %v380 = vunpack.c.h.b16 %v104
    %v381 = vunpack.c.l.b16 %v105
    %v382 = vunpack.c.h.b16 %v105
    %v383 = vunpack.c.l.b16 %v106
    %v384 = vunpack.c.h.b16 %v106
    %v385 = vunpack.c.l.b16 %v107
    %v386 = vunpack.c.h.b16 %v107
    %v387 = vunpack.c.l.b16 %v108
    %v388 = vunpack.c.h.b16 %v108
    %v389 = vunpack.c.l.b16 %v109
    %v390 = vunpack.c.h.b16 %v109
    %v391 = vunpack.c.l.b16 %v110
    %v392 = vunpack.c.h.b16 %v110
    %v393 = vunpack.c.l.b16 %v111
    %v394 = vunpack.c.h.b16 %v111
    %v395 = vunpack.c.l.b16 %v112
    %v396 = vunpack.c.h.b16 %v112
    %v397 = vunpack.c.l.b16 %v113
    %v398 = vunpack.c.h.b16 %v113
    %v399 = vunpack.c.l.b16 %v114
    %v400 = vunpack.c.h.b16 %v114
    %v401 = vunpack.c.l.b16 %v115
    %v402 = vunpack.c.h.b16 %v115
    %v403 = vunpack.c.l.b16 %v116
    %v404 = vunpack.c.h.b16 %v116
    %v405 = vunpack.c.l.b16 %v117
    %v406 = vunpack.c.h.b16 %v117
    %v407 = vunpack.c.l.b16 %v118
    %v408 = vunpack.c.h.b16 %v118
    %v409 = vunpack.c.l.b16 %v119
    %v410 = vunpack.c.h.b16 %v119
    %v411 = vunpack.c.l.b16 %v120
    %v412 = vunpack.c.h.b16 %v120
    %v413 = vunpack.c.l.b16 %v121
    %v414 = vunpack.c.h.b16 %v121
    %v415 = vunpack.c.l.b16 %v122
    %v416 = vunpack.c.h.b16 %v122
    %v417 = vunpack.c.l.b16 %v123
    %v418 = vunpack.c.h.b16 %v123
    %v419 = vunpack.c.l.b16 %v124
    %v420 = vunpack.c.h.b16 %v124
    %v421 = vunpack.c.l.b16 %v125
    %v422 = vunpack.c.h.b16 %v125
    %v423 = vunpack.c.l.b16 %v126
    %v424 = vunpack.c.h.b16 %v126
    %v425 = vunpack.c.l.b16 %v127
    %v426 = vunpack.c.h.b16 %v127
    %v427 = vunpack.c.l.b16 %v128
    %v428 = vunpack.c.h.b16 %v128
    %v429 = vunpack.c.l.b16 %v129
    %v430 = vunpack.c.h.b16 %v129
    %v431 = vunpack.c.l.b16 %v130
    %v432 = vunpack.c.h.b16 %v130
    %v433 = vunpack.c.l.b16 %v131
    %v434 = vunpack.c.h.b16 %v131
    %v435 = vunpack.c.l.b16 %v132
    %v436 = vunpack.c.h.b16 %v132
    %v437 = vunpack.c.l.b16 %v133
    %v438 = vunpack.c.h.b16 %v133
    %v439 = vunpack.c.l.b16 %v134
    %v440 = vunpack.c.h.b16 %v134
    %v441 = vunpack.c.l.b16 %v135
    %v442 = vunpack.c.h.b16 %v135
    %v443 = vunpack.c.l.b16 %v136
    %v444 = vunpack.c.h.b16 %v136
    %v445 = vunpack.c.l.b16 %v137
    %v446 = vunpack.c.h.b16 %v137
    %v447 = vunpack.c.l.b16 %v138
    %v448 = vunpack.c.h.b16 %v138
    %v449 = vunpack.c.l.b16 %v139
    %v450 = vunpack.c.h.b16 %v139
    %v451 = vunpack.c.l.b16 %v140
    %v452 = vunpack.c.h.b16 %v140
    %v453 = vunpack.c.l.b16 %v141
    %v454 = vunpack.c.h.b16 %v141
    %v455 = vunpack.c.l.b16 %v142
    %v456 = vunpack.c.h.b16 %v142
    %v457 = vunpack.c.l.b16 %v143
    %v458 = vunpack.c.h.b16 %v143
    %v459 = vunpack.c.l.b16 %v144
    %v460 = vunpack.c.h.b16 %v144
    %v461 = vunpack.c.l.b16 %v145
    %v462 = vunpack.c.h.b16 %v145
    %v463 = vunpack.c.l.b16 %v146
    %v464 = vunpack.c.h.b16 %v146
    %v465 = vunpack.c.l.b16 %v147
    %v466 = vunpack.c.h.b16 %v147
    %v467 = vunpack.c.l.b16 %v148
    %v468 = vunpack.c.h.b16 %v148
    %v469 = vunpack.c.l.b16 %v149
    %v470 = vunpack.c.h.b16 %v149
    %v471 = vunpack.c.l.b16 %v150
    %v472 = vunpack.c.h.b16 %v150
    %v473 = vunpack.c.l.b16 %v151
    %v474 = vunpack.c.h.b16 %v151
    %v475 = vunpack.c.l.b16 %v152
    %v476 = vunpack.c.h.b16 %v152
    %v477 = vunpack.c.l.b16 %v153
    %v478 = vunpack.c.h.b16 %v153
    %v479 = vunpack.c.l.b16 %v154
    %v480 = vunpack.c.h.b16 %v154
    %v481 = vunpack.c.l.b16 %v155
    %v482 = vunpack.c.h.b16 %v155
    %v483 = vunpack.c.l.b16 %v156
    %v484 = vunpack.c.h.b16 %v156
    %v485 = vunpack.c.l.b16 %v157
    %v486 = vunpack.c.h.b16 %v157
    %v487 = vunpack.c.l.b16 %v158
    %v488 = vunpack.c.h.b16 %v158
    %v489 = vunpack.c.l.b16 %v159
    %v490 = vunpack.c.h.b16 %v159
    %v491 = vunpack.c.l.b16 %v160
    %v492 = vunpack.c.h.b16 %v160
    %v493 = vunpack.c.l.b16 %v161
    %v494 = vunpack.c.h.b16 %v161
    %v495 = vunpack.c.l.b16 %v162
    %v496 = vunpack.c.h.b16 %v162
    %v497 = vunpack.c.l.b16 %v163
    %v498 = vunpack.c.h.b16 %v163
    %v499 = vunpack.c.l.b16 %v164
    %v500 = vunpack.c.h.b16 %v164
    %v501 = vunpack.c.l.b16 %v165
    %v502 = vunpack.c.h.b16 %v165
    %v503 = vunpack.c.l.b16 %v166
    %v504 = vunpack.c.h.b16 %v166
    %v505 = vunpack.c.l.b16 %v167
    %v506 = vunpack.c.h.b16 %v167
    %v507 = vunpack.c.l.b16 %v168
    %v508 = vunpack.c.h.b16 %v168
    %v509 = vunpack.c.l.b16 %v169
    %v510 = vunpack.c.h.b16 %v169
    %v511 = vunpack.c.l.b16 %v170
    %v512 = vunpack.c.h.b16 %v170
    %v513 = vunpack.c.l.b16 %v171
    %v514 = vunpack.c.h.b16 %v171
    %v515 = vunpack.c.l.b16 %v172
    %v516 = vunpack.c.h.b16 %v172
    %v517 = vunpack.c.l.b16 %v173
    %v518 = vunpack.c.h.b16 %v173
    %v519 = vunpack.c.l.b16 %v174
    %v520 = vunpack.c.h.b16 %v174
    %v521 = vunpack.c.l.b16 %v175
    %v522 = vunpack.c.h.b16 %v175
    %v523 = vunpack.c.l.b16 %v176
    %v524 = vunpack.c.h.b16 %v176
    %v525 = vunpack.c.l.b16 %v177
    %v526 = vunpack.c.h.b16 %v177
    %v527 = vunpack.c.l.b16 %v178
    %v528 = vunpack.c.h.b16 %v178
    %v529 = vunpack.c.l.b16 %v179
    %v530 = vunpack.c.h.b16 %v179
    %v531 = vunpack.c.l.b16 %v180
    %v532 = vunpack.c.h.b16 %v180
    %v533 = vunpack.c.l.b16 %v181
    %v534 = vunpack.c.h.b16 %v181
    %v535 = vunpack.c.l.b16 %v182
    %v536 = vunpack.c.h.b16 %v182
    %v537 = vunpack.c.l.b16 %v183
    %v538 = vunpack.c.h.b16 %v183
    %v539 = vunpack.c.l.b16 %v184
    %v540 = vunpack.c.h.b16 %v184
    %v541 = vunpack.c.l.b16 %v185
    %v542 = vunpack.c.h.b16 %v185
    %v543 = vunpack.c.l.b16 %v186
    %v544 = vunpack.c.h.b16 %v186
    %v545 = vunpack.c.l.b16 %v187
    %v546 = vunpack.c.h.b16 %v187
    %v547 = vunpack.c.l.b16 %v188
    %v548 = vunpack.c.h.b16 %v188
    %v549 = vunpack.c.l.b16 %v189
    %v550 = vunpack.c.h.b16 %v189
    %v551 = vunpack.c.l.b16 %v190
    %v552 = vunpack.c.h.b16 %v190
    %v553 = vunpack.c.l.b16 %v191
    %v554 = vunpack.c.h.b16 %v191
    %v555 = vunpack.c.l.b16 %v192
    %v556 = vunpack.c.h.b16 %v192
    %v557 = vunpack.c.l.b16 %v193
    %v558 = vunpack.c.h.b16 %v193
    %v559 = vunpack.c.l.b16 %v194
    %v560 = vunpack.c.h.b16 %v194
    %v561 = vunpack.c.l.b16 %v195
    %v562 = vunpack.c.h.b16 %v195
    %v563 = vunpack.c.l.b16 %v196
    %v564 = vunpack.c.h.b16 %v196
    %v565 = vunpack.c.l.b16 %v197
    %v566 = vunpack.c.h.b16 %v197
    %v567 = vunpack.c.l.b16 %v198
    %v568 = vunpack.c.h.b16 %v198
    %v569 = vunpack.c.l.b16 %v199
    %v570 = vunpack.c.h.b16 %v199
    %v571 = vunpack.c.l.b16 %v200
    %v572 = vunpack.c.h.b16 %v200
    %v573 = vunpack.c.l.b16 %v201
    %v574 = vunpack.c.h.b16 %v201
    %v575 = vunpack.c.l.b16 %v202
    %v576 = vunpack.c.h.b16 %v202
    %v577 = vunpack.c.l.b16 %v203
    %v578 = vunpack.c.h.b16 %v203
    %v579 = vunpack.c.l.b16 %v204
    %v580 = vunpack.c.h.b16 %v204
    %v581 = vunpack.c.l.b16 %v205
    %v582 = vunpack.c.h.b16 %v205
    %v583 = vunpack.c.l.b16 %v206
    %v584 = vunpack.c.h.b16 %v206
    %v585 = vunpack.c.l.b16 %v207
    %v586 = vunpack.c.h.b16 %v207
    %v587 = vunpack.c.l.b16 %v208
    %v588 = vunpack.c.h.b16 %v208
    %v589 = vunpack.c.l.b16 %v209
    %v590 = vunpack.c.h.b16 %v209
    %v591 = vunpack.c.l.b16 %v210
    %v592 = vunpack.c.h.b16 %v210
    %v593 = vunpack.c.l.b16 %v211
    %v594 = vunpack.c.h.b16 %v211
    %v595 = vunpack.c.l.b16 %v212
    %v596 = vunpack.c.h.b16 %v212
    %v597 = vunpack.c.l.b16 %v213
    %v598 = vunpack.c.h.b16 %v213
    %v599 = vunpack.c.l.b16 %v214
    %v600 = vunpack.c.h.b16 %v214
    %v601 = vunpack.c.l.b16 %v215
    %v602 = vunpack.c.h.b16 %v215
    %v603 = vunpack.c.l.b16 %v216
    %v604 = vunpack.c.h.b16 %v216
    %v605 = vunpack.c.l.b16 %v217
    %v606 = vunpack.c.h.b16 %v217
    %v607 = vunpack.c.l.b16 %v218
    %v608 = vunpack.c.h.b16 %v218
    %v609 = vunpack.c.l.b16 %v219
    %v610 = vunpack.c.h.b16 %v219
    %v611 = vunpack.c.l.b16 %v220
    %v612 = vunpack.c.h.b16 %v220
    %v613 = vunpack.c.l.b16 %v221
    %v614 = vunpack.c.h.b16 %v221
    %v615 = vunpack.c.l.b16 %v222
    %v616 = vunpack.c.h.b16 %v222
    %v617 = vunpack.c.l.b16 %v223
    %v618 = vunpack.c.h.b16 %v223
    %v619 = vunpack.c.l.b16 %v224
    %v620 = vunpack.c.h.b16 %v224
    %v621 = vpack.c.b16 %v367, %v365
    %v622 = vpack.c.b16 %v368, %v366
    %v623 = vpack.c.b16 %v371, %v369
    %v624 = vpack.c.b16 %v372, %v370
    %v625 = vpack.c.b16 %v375, %v373
    %v626 = vpack.c.b16 %v376, %v374
    %v627 = vpack.c.b16 %v379, %v377
    %v628 = vpack.c.b16 %v380, %v378
    %v629 = vpack.c.b16 %v383, %v381
    %v630 = vpack.c.b16 %v384, %v382
    %v631 = vpack.c.b16 %v387, %v385
    %v632 = vpack.c.b16 %v388, %v386
    %v633 = vpack.c.b16 %v391, %v389
    %v634 = vpack.c.b16 %v392, %v390
    %v635 = vpack.c.b16 %v395, %v393
    %v636 = vpack.c.b16 %v396, %v394
    %v637 = vpack.c.b16 %v399, %v397
    %v638 = vpack.c.b16 %v400, %v398
    %v639 = vpack.c.b16 %v403, %v401
    %v640 = vpack.c.b16 %v404, %v402
    %v641 = vpack.c.b16 %v407, %v405
    %v642 = vpack.c.b16 %v408, %v406
    %v643 = vpack.c.b16 %v411, %v409
    %v644 = vpack.c.b16 %v412, %v410
    %v645 = vpack.c.b16 %v415, %v413
    %v646 = vpack.c.b16 %v416, %v414
    %v647 = vpack.c.b16 %v419, %v417
    %v648 = vpack.c.b16 %v420, %v418
    %v649 = vpack.c.b16 %v423, %v421
    %v650 = vpack.c.b16 %v424, %v422
    %v651 = vpack.c.b16 %v427, %v425
    %v652 = vpack.c.b16 %v428, %v426
    %v653 = vpack.c.b16 %v431, %v429
    %v654 = vpack.c.b16 %v432, %v430
    %v655 = vpack.c.b16 %v435, %v433
    %v656 = vpack.c.b16 %v436, %v434
    %v657 = vpack.c.b16 %v439, %v437
    %v658 = vpack.c.b16 %v440, %v438
    %v659 = vpack.c.b16 %v443, %v441
    %v660 = vpack.c.b16 %v444, %v442
    %v661 = vpack.c.b16 %v447, %v445
    %v662 = vpack.c.b16 %v448, %v446
    %v663 = vpack.c.b16 %v451, %v449
    %v664 = vpack.c.b16 %v452, %v450
    %v665 = vpack.c.b16 %v455, %v453
    %v666 = vpack.c.b16 %v456, %v454
    %v667 = vpack.c.b16 %v459, %v457
    %v668 = vpack.c.b16 %v460, %v458
    %v669 = vpack.c.b16 %v463, %v461
    %v670 = vpack.c.b16 %v464, %v462
    %v671 = vpack.c.b16 %v467, %v465
    %v672 = vpack.c.b16 %v468, %v466
    %v673 = vpack.c.b16 %v471, %v469
    %v674 = vpack.c.b16 %v472, %v470
    %v675 = vpack.c.b16 %v475, %v473
    %v676 = vpack.c.b16 %v476, %v474
    %v677 = vpack.c.b16 %v479, %v477
    %v678 = vpack.c.b16 %v480, %v478
    %v679 = vpack.c.b16 %v483, %v481
    %v680 = vpack.c.b16 %v484, %v482
    %v681 = vpack.c.b16 %v487, %v485
    %v682 = vpack.c.b16 %v488, %v486
    %v683 = vpack.c.b16 %v491, %v489
    %v684 = vpack.c.b16 %v492, %v490
    %v685 = vpack.c.b16 %v495, %v493
    %v686 = vpack.c.b16 %v496, %v494
    %v687 = vpack.c.b16 %v499, %v497
    %v688 = vpack.c.b16 %v500, %v498
    %v689 = vpack.c.b16 %v503, %v501
    %v690 = vpack.c.b16 %v504, %v502
    %v691 = vpack.c.b16 %v507, %v505
    %v692 = vpack.c.b16 %v508, %v506
    %v693 = vpack.c.b16 %v511, %v509
    %v694 = vpack.c.b16 %v512, %v510
    %v695 = vpack.c.b16 %v515, %v513
    %v696 = vpack.c.b16 %v516, %v514
    %v697 = vpack.c.b16 %v519, %v517
    %v698 = vpack.c.b16 %v520, %v518
    %v699 = vpack.c.b16 %v523, %v521
    %v700 = vpack.c.b16 %v524, %v522
    %v701 = vpack.c.b16 %v527, %v525
    %v702 = vpack.c.b16 %v528, %v526
    %v703 = vpack.c.b16 %v531, %v529
    %v704 = vpack.c.b16 %v532, %v530
    %v705 = vpack.c.b16 %v535, %v533
    %v706 = vpack.c.b16 %v536, %v534
    %v707 = vpack.c.b16 %v539, %v537
    %v708 = vpack.c.b16 %v540, %v538
    %v709 = vpack.c.b16 %v543, %v541
    %v710 = vpack.c.b16 %v544, %v542
    %v711 = vpack.c.b16 %v547, %v545
    %v712 = vpack.c.b16 %v548, %v546
    %v713 = vpack.c.b16 %v551, %v549
    %v714 = vpack.c.b16 %v552, %v550
    %v715 = vpack.c.b16 %v555, %v553
    %v716 = vpack.c.b16 %v556, %v554
    %v717 = vpack.c.b16 %v559, %v557
    %v718 = vpack.c.b16 %v560, %v558
    %v719 = vpack.c.b16 %v563, %v561
    %v720 = vpack.c.b16 %v564, %v562
    %v721 = vpack.c.b16 %v567, %v565
    %v722 = vpack.c.b16 %v568, %v566
    %v723 = vpack.c.b16 %v571, %v569
    %v724 = vpack.c.b16 %v572, %v570
    %v725 = vpack.c.b16 %v575, %v573
    %v726 = vpack.c.b16 %v576, %v574
    %v727 = vpack.c.b16 %v579, %v577
    %v728 = vpack.c.b16 %v580, %v578
    %v729 = vpack.c.b16 %v583, %v581
    %v730 = vpack.c.b16 %v584, %v582
    %v731 = vpack.c.b16 %v587, %v585
    %v732 = vpack.c.b16 %v588, %v586
    %v733 = vpack.c.b16 %v591, %v589
    %v734 = vpack.c.b16 %v592, %v590
    %v735 = vpack.c.b16 %v595, %v593
    %v736 = vpack.c.b16 %v596, %v594
    %v737 = vpack.c.b16 %v599, %v597
    %v738 = vpack.c.b16 %v600, %v598
    %v739 = vpack.c.b16 %v603, %v601
    %v740 = vpack.c.b16 %v604, %v602
    %v741 = vpack.c.b16 %v607, %v605
    %v742 = vpack.c.b16 %v608, %v606
    %v743 = vpack.c.b16 %v611, %v609
    %v744 = vpack.c.b16 %v612, %v610
    %v745 = vpack.c.b16 %v615, %v613
    %v746 = vpack.c.b16 %v616, %v614
    %v747 = vpack.c.b16 %v619, %v617
    %v748 = vpack.c.b16 %v620, %v618
    %877 = vmatprep.subr.bf16.mxu0 %v636
    %878 = vmatpush1.bf16.msra.mxu0 %v635
    %879 = vmatprep.subr.bf16.mxu0 %v634
    %880 = vmatpush1.bf16.msra.mxu0 %v633
    %881 = vmatprep.subr.bf16.mxu0 %v632
    %882 = vmatpush1.bf16.msra.mxu0 %v631
    %883 = vmatprep.subr.bf16.mxu0 %v630
    %884 = vmatpush1.bf16.msra.mxu0 %v629
    %885 = vmatprep.subr.bf16.mxu0 %v628
    %886 = vmatpush1.bf16.msra.mxu0 %v627
    %887 = vmatprep.subr.bf16.mxu0 %v626
    %888 = vmatpush1.bf16.msra.mxu0 %v625
    %889 = vmatprep.subr.bf16.mxu0 %v624
    %890 = vmatpush1.bf16.msra.mxu0 %v623
    %891 = vmatprep.subr.bf16.mxu0 %v622
    %892 = vmatpush1.bf16.msra.mxu0 %v621
    %893 = vmatprep.subr.bf16.mxu0 %v652
    %894 = vmatpush2.bf16.msra.mxu0 %v651
    %895 = vmatprep.subr.bf16.mxu0 %v650
    %896 = vmatpush2.bf16.msra.mxu0 %v649
    %897 = vmatprep.subr.bf16.mxu0 %v648
    %898 = vmatpush2.bf16.msra.mxu0 %v647
    %899 = vmatprep.subr.bf16.mxu0 %v646
    %900 = vmatpush2.bf16.msra.mxu0 %v645
    %901 = vmatprep.subr.bf16.mxu0 %v644
    %902 = vmatpush2.bf16.msra.mxu0 %v643
    %903 = vmatprep.subr.bf16.mxu0 %v642
    %904 = vmatpush2.bf16.msra.mxu0 %v641
    %905 = vmatprep.subr.bf16.mxu0 %v640
    %906 = vmatpush2.bf16.msra.mxu0 %v639
    %907 = vmatprep.subr.bf16.mxu0 %v638
    %908 = vmatpush2.bf16.msra.mxu0 %v637
    %909 = vmatprep.mubr.bf16.mxu0 %v90
    %910 = vmatmul.mubr.bf16.gmra.mxu0 %v89
    %v911 = vpop.f32.mrf.mxu0
    %v912 = vadd.f32 %v230, %v911
    %v913 = vpop.f32.mrf.mxu0
    %v914 = vadd.f32 %v234, %v913
    %v915 = vpop.f32.mrf.mxu0
    %v916 = vpop.f32.mrf.mxu0
    %917 = vdwg.mxu0
    %918 = vmatprep.subr.bf16.mxu0 %v668
    %919 = vmatpush1.bf16.msra.mxu0 %v667
    %920 = vmatprep.subr.bf16.mxu0 %v666
    %921 = vmatpush1.bf16.msra.mxu0 %v665
    %922 = vmatprep.subr.bf16.mxu0 %v664
    %923 = vmatpush1.bf16.msra.mxu0 %v663
    %924 = vmatprep.subr.bf16.mxu0 %v662
    %925 = vmatpush1.bf16.msra.mxu0 %v661
    %926 = vmatprep.subr.bf16.mxu0 %v660
    %927 = vmatpush1.bf16.msra.mxu0 %v659
    %928 = vmatprep.subr.bf16.mxu0 %v658
    %929 = vmatpush1.bf16.msra.mxu0 %v657
    %930 = vmatprep.subr.bf16.mxu0 %v656
    %931 = vmatpush1.bf16.msra.mxu0 %v655
    %932 = vmatprep.subr.bf16.mxu0 %v654
    %933 = vmatpush1.bf16.msra.mxu0 %v653
    %934 = vmatprep.subr.bf16.mxu0 %v684
    %935 = vmatpush2.bf16.msra.mxu0 %v683
    %936 = vmatprep.subr.bf16.mxu0 %v682
    %937 = vmatpush2.bf16.msra.mxu0 %v681
    %938 = vmatprep.subr.bf16.mxu0 %v680
    %939 = vmatpush2.bf16.msra.mxu0 %v679
    %940 = vmatprep.subr.bf16.mxu0 %v678
    %941 = vmatpush2.bf16.msra.mxu0 %v677
    %942 = vmatprep.subr.bf16.mxu0 %v676
    %943 = vmatpush2.bf16.msra.mxu0 %v675
    %944 = vmatprep.subr.bf16.mxu0 %v674
    %945 = vmatpush2.bf16.msra.mxu0 %v673
    %946 = vmatprep.subr.bf16.mxu0 %v672
    %947 = vmatpush2.bf16.msra.mxu0 %v671
    %948 = vmatprep.subr.bf16.mxu0 %v670
    %949 = vmatpush2.bf16.msra.mxu0 %v669
    %950 = vmatprep.mubr.bf16.mxu0 %v92
    %951 = vmatmul.mubr.bf16.gmra.mxu0 %v91
    %v952 = vpop.f32.mrf.mxu0
    %v953 = vadd.f32 %v912, %v952
    %v954 = vpop.f32.mrf.mxu0
    %v955 = vadd.f32 %v914, %v954
    %v956 = vpop.f32.mrf.mxu0
    %v957 = vpop.f32.mrf.mxu0
    %958 = vdwg.mxu0
    %959 = vmatprep.subr.bf16.mxu0 %v700
    %960 = vmatpush1.bf16.msra.mxu0 %v699
    %961 = vmatprep.subr.bf16.mxu0 %v698
    %962 = vmatpush1.bf16.msra.mxu0 %v697
    %963 = vmatprep.subr.bf16.mxu0 %v696
    %964 = vmatpush1.bf16.msra.mxu0 %v695
    %965 = vmatprep.subr.bf16.mxu0 %v694
    %966 = vmatpush1.bf16.msra.mxu0 %v693
    %967 = vmatprep.subr.bf16.mxu0 %v692
    %968 = vmatpush1.bf16.msra.mxu0 %v691
    %969 = vmatprep.subr.bf16.mxu0 %v690
    %970 = vmatpush1.bf16.msra.mxu0 %v689
    %971 = vmatprep.subr.bf16.mxu0 %v688
    %972 = vmatpush1.bf16.msra.mxu0 %v687
    %973 = vmatprep.subr.bf16.mxu0 %v686
    %974 = vmatpush1.bf16.msra.mxu0 %v685
    %975 = vmatprep.subr.bf16.mxu0 %v716
    %976 = vmatpush2.bf16.msra.mxu0 %v715
    %977 = vmatprep.subr.bf16.mxu0 %v714
    %978 = vmatpush2.bf16.msra.mxu0 %v713
    %979 = vmatprep.subr.bf16.mxu0 %v712
    %980 = vmatpush2.bf16.msra.mxu0 %v711
    %981 = vmatprep.subr.bf16.mxu0 %v710
    %982 = vmatpush2.bf16.msra.mxu0 %v709
    %983 = vmatprep.subr.bf16.mxu0 %v708
    %984 = vmatpush2.bf16.msra.mxu0 %v707
    %985 = vmatprep.subr.bf16.mxu0 %v706
    %986 = vmatpush2.bf16.msra.mxu0 %v705
    %987 = vmatprep.subr.bf16.mxu0 %v704
    %988 = vmatpush2.bf16.msra.mxu0 %v703
    %989 = vmatprep.subr.bf16.mxu0 %v702
    %990 = vmatpush2.bf16.msra.mxu0 %v701
    %991 = vmatprep.mubr.bf16.mxu0 %v94
    %992 = vmatmul.mubr.bf16.gmra.mxu0 %v93
    %v993 = vpop.f32.mrf.mxu0
    %v994 = vadd.f32 %v953, %v993
    %v995 = vpop.f32.mrf.mxu0
    %v996 = vadd.f32 %v955, %v995
    %v997 = vpop.f32.mrf.mxu0
    %v998 = vpop.f32.mrf.mxu0
    %999 = vdwg.mxu0
    %1000 = vmatprep.subr.bf16.mxu0 %v732
    %1001 = vmatpush1.bf16.msra.mxu0 %v731
    %1002 = vmatprep.subr.bf16.mxu0 %v730
    %1003 = vmatpush1.bf16.msra.mxu0 %v729
    %1004 = vmatprep.subr.bf16.mxu0 %v728
    %1005 = vmatpush1.bf16.msra.mxu0 %v727
    %1006 = vmatprep.subr.bf16.mxu0 %v726
    %1007 = vmatpush1.bf16.msra.mxu0 %v725
    %1008 = vmatprep.subr.bf16.mxu0 %v724
    %1009 = vmatpush1.bf16.msra.mxu0 %v723
    %1010 = vmatprep.subr.bf16.mxu0 %v722
    %1011 = vmatpush1.bf16.msra.mxu0 %v721
    %1012 = vmatprep.subr.bf16.mxu0 %v720
    %1013 = vmatpush1.bf16.msra.mxu0 %v719
    %1014 = vmatprep.subr.bf16.mxu0 %v718
    %1015 = vmatpush1.bf16.msra.mxu0 %v717
    %1016 = vmatprep.subr.bf16.mxu0 %v748
    %1017 = vmatpush2.bf16.msra.mxu0 %v747
    %1018 = vmatprep.subr.bf16.mxu0 %v746
    %1019 = vmatpush2.bf16.msra.mxu0 %v745
    %1020 = vmatprep.subr.bf16.mxu0 %v744
    %1021 = vmatpush2.bf16.msra.mxu0 %v743
    %1022 = vmatprep.subr.bf16.mxu0 %v742
    %1023 = vmatpush2.bf16.msra.mxu0 %v741
    %1024 = vmatprep.subr.bf16.mxu0 %v740
    %1025 = vmatpush2.bf16.msra.mxu0 %v739
    %1026 = vmatprep.subr.bf16.mxu0 %v738
    %1027 = vmatpush2.bf16.msra.mxu0 %v737
    %1028 = vmatprep.subr.bf16.mxu0 %v736
    %1029 = vmatpush2.bf16.msra.mxu0 %v735
    %1030 = vmatprep.subr.bf16.mxu0 %v734
    %1031 = vmatpush2.bf16.msra.mxu0 %v733
    %1032 = vmatprep.mubr.bf16.mxu0 %v96
    %1033 = vmatmul.mubr.bf16.gmra.mxu0 %v95
    %v1034 = vpop.f32.mrf.mxu0
    %v1035 = vadd.f32 %v994, %v1034
    %v1036 = vpop.f32.mrf.mxu0
    %v1037 = vadd.f32 %v996, %v1036
    %v1038 = vpop.f32.mrf.mxu0
    %v1039 = vpop.f32.mrf.mxu0
    %1040 = vdwg.mxu0
    %v1041 = vmax.f32 %v1035, 0.0
    %v1042 = vmax.f32 %v1037, 0.0
    %v1043 = vpack.c.bf16 %v1041, %v1041
    %v1044 = vpack.c.bf16 %v1042, %v1042
    %v1045 = vld [vmem:[#allocation4] sm:$0xff]
    %v1046 = vld [vmem:[#allocation4 + $0x8] sm:$0xff]
    %v1047 = vld [vmem:[#allocation4 + $0x10] sm:$0xff]
    %v1048 = vld [vmem:[#allocation4 + $0x18] sm:$0xff]
    %v1049 = vld [vmem:[#allocation4 + $0x20] sm:$0xff]
    %v1050 = vld [vmem:[#allocation4 + $0x28] sm:$0xff]
    %v1051 = vld [vmem:[#allocation4 + $0x30] sm:$0xff]
    %v1052 = vld [vmem:[#allocation4 + $0x38] sm:$0xff]
    %v1053 = vld [vmem:[#allocation4 + $0x40] sm:$0xff]
    %v1054 = vld [vmem:[#allocation4 + $0x48] sm:$0xff]
    %v1055 = vld [vmem:[#allocation4 + $0x50] sm:$0xff]
    %v1056 = vld [vmem:[#allocation4 + $0x58] sm:$0xff]
    %v1057 = vld [vmem:[#allocation4 + $0x60] sm:$0xff]
    %v1058 = vld [vmem:[#allocation4 + $0x68] sm:$0xff]
    %v1059 = vld [vmem:[#allocation4 + $0x70] sm:$0xff]
    %v1060 = vld [vmem:[#allocation4 + $0x78] sm:$0xff]
    %v1061 = vld [vmem:[#allocation4 + $0x80] sm:$0xff]
    %v1062 = vld [vmem:[#allocation4 + $0x88] sm:$0xff]
    %v1063 = vld [vmem:[#allocation4 + $0x90] sm:$0xff]
    %v1064 = vld [vmem:[#allocation4 + $0x98] sm:$0xff]
    %v1065 = vld [vmem:[#allocation4 + $0xa0] sm:$0xff]
    %v1066 = vld [vmem:[#allocation4 + $0xa8] sm:$0xff]
    %v1067 = vld [vmem:[#allocation4 + $0xb0] sm:$0xff]
    %v1068 = vld [vmem:[#allocation4 + $0xb8] sm:$0xff]
    %v1069 = vld [vmem:[#allocation4 + $0xc0] sm:$0xff]
    %v1070 = vld [vmem:[#allocation4 + $0xc8] sm:$0xff]
    %v1071 = vld [vmem:[#allocation4 + $0xd0] sm:$0xff]
    %v1072 = vld [vmem:[#allocation4 + $0xd8] sm:$0xff]
    %v1073 = vld [vmem:[#allocation4 + $0xe0] sm:$0xff]
    %v1074 = vld [vmem:[#allocation4 + $0xe8] sm:$0xff]
    %v1075 = vld [vmem:[#allocation4 + $0xf0] sm:$0xff]
    %v1076 = vld [vmem:[#allocation4 + $0xf8] sm:$0xff]
    %v1077 = vld [vmem:[%s4] sm:$0x3]
    %v1079 = vlaneseq
    %v1080 = vshrl.u32 %v1079, 7
    %v1081 = vsub.s32 0, %v1080
    %v1082 = vrot.slane %v1077, %v1081
    %v1083 = vlaneseq
    %v1084 = vshrl.u32 %v1083, 7
    %v1085 = vsub.s32 1, %v1084
    %v1086 = vrot.slane %v1077, %v1085
    %v1121 = vunpack.c.l.b16 %v1045
    %v1122 = vunpack.c.h.b16 %v1045
    %v1123 = vunpack.c.l.b16 %v1046
    %v1124 = vunpack.c.h.b16 %v1046
    %v1125 = vunpack.c.l.b16 %v1047
    %v1126 = vunpack.c.h.b16 %v1047
    %v1127 = vunpack.c.l.b16 %v1048
    %v1128 = vunpack.c.h.b16 %v1048
    %v1129 = vunpack.c.l.b16 %v1049
    %v1130 = vunpack.c.h.b16 %v1049
    %v1131 = vunpack.c.l.b16 %v1050
    %v1132 = vunpack.c.h.b16 %v1050
    %v1133 = vunpack.c.l.b16 %v1051
    %v1134 = vunpack.c.h.b16 %v1051
    %v1135 = vunpack.c.l.b16 %v1052
    %v1136 = vunpack.c.h.b16 %v1052
    %v1137 = vunpack.c.l.b16 %v1053
    %v1138 = vunpack.c.h.b16 %v1053
    %v1139 = vunpack.c.l.b16 %v1054
    %v1140 = vunpack.c.h.b16 %v1054
    %v1141 = vunpack.c.l.b16 %v1055
    %v1142 = vunpack.c.h.b16 %v1055
    %v1143 = vunpack.c.l.b16 %v1056
    %v1144 = vunpack.c.h.b16 %v1056
    %v1145 = vunpack.c.l.b16 %v1057
    %v1146 = vunpack.c.h.b16 %v1057
    %v1147 = vunpack.c.l.b16 %v1058
    %v1148 = vunpack.c.h.b16 %v1058
    %v1149 = vunpack.c.l.b16 %v1059
    %v1150 = vunpack.c.h.b16 %v1059
    %v1151 = vunpack.c.l.b16 %v1060
    %v1152 = vunpack.c.h.b16 %v1060
    %v1153 = vunpack.c.l.b16 %v1061
    %v1154 = vunpack.c.h.b16 %v1061
    %v1155 = vunpack.c.l.b16 %v1062
    %v1156 = vunpack.c.h.b16 %v1062
    %v1157 = vunpack.c.l.b16 %v1063
    %v1158 = vunpack.c.h.b16 %v1063
    %v1159 = vunpack.c.l.b16 %v1064
    %v1160 = vunpack.c.h.b16 %v1064
    %v1161 = vunpack.c.l.b16 %v1065
    %v1162 = vunpack.c.h.b16 %v1065
    %v1163 = vunpack.c.l.b16 %v1066
    %v1164 = vunpack.c.h.b16 %v1066
    %v1165 = vunpack.c.l.b16 %v1067
    %v1166 = vunpack.c.h.b16 %v1067
    %v1167 = vunpack.c.l.b16 %v1068
    %v1168 = vunpack.c.h.b16 %v1068
    %v1169 = vunpack.c.l.b16 %v1069
    %v1170 = vunpack.c.h.b16 %v1069
    %v1171 = vunpack.c.l.b16 %v1070
    %v1172 = vunpack.c.h.b16 %v1070
    %v1173 = vunpack.c.l.b16 %v1071
    %v1174 = vunpack.c.h.b16 %v1071
    %v1175 = vunpack.c.l.b16 %v1072
    %v1176 = vunpack.c.h.b16 %v1072
    %v1177 = vunpack.c.l.b16 %v1073
    %v1178 = vunpack.c.h.b16 %v1073
    %v1179 = vunpack.c.l.b16 %v1074
    %v1180 = vunpack.c.h.b16 %v1074
    %v1181 = vunpack.c.l.b16 %v1075
    %v1182 = vunpack.c.h.b16 %v1075
    %v1183 = vunpack.c.l.b16 %v1076
    %v1184 = vunpack.c.h.b16 %v1076
    %v1185 = vpack.c.b16 %v1123, %v1121
    %v1186 = vpack.c.b16 %v1124, %v1122
    %v1187 = vpack.c.b16 %v1127, %v1125
    %v1188 = vpack.c.b16 %v1128, %v1126
    %v1189 = vpack.c.b16 %v1131, %v1129
    %v1190 = vpack.c.b16 %v1132, %v1130
    %v1191 = vpack.c.b16 %v1135, %v1133
    %v1192 = vpack.c.b16 %v1136, %v1134
    %v1193 = vpack.c.b16 %v1139, %v1137
    %v1194 = vpack.c.b16 %v1140, %v1138
    %v1195 = vpack.c.b16 %v1143, %v1141
    %v1196 = vpack.c.b16 %v1144, %v1142
    %v1197 = vpack.c.b16 %v1147, %v1145
    %v1198 = vpack.c.b16 %v1148, %v1146
    %v1199 = vpack.c.b16 %v1151, %v1149
    %v1200 = vpack.c.b16 %v1152, %v1150
    %v1201 = vpack.c.b16 %v1155, %v1153
    %v1202 = vpack.c.b16 %v1156, %v1154
    %v1203 = vpack.c.b16 %v1159, %v1157
    %v1204 = vpack.c.b16 %v1160, %v1158
    %v1205 = vpack.c.b16 %v1163, %v1161
    %v1206 = vpack.c.b16 %v1164, %v1162
    %v1207 = vpack.c.b16 %v1167, %v1165
    %v1208 = vpack.c.b16 %v1168, %v1166
    %v1209 = vpack.c.b16 %v1171, %v1169
    %v1210 = vpack.c.b16 %v1172, %v1170
    %v1211 = vpack.c.b16 %v1175, %v1173
    %v1212 = vpack.c.b16 %v1176, %v1174
    %v1213 = vpack.c.b16 %v1179, %v1177
    %v1214 = vpack.c.b16 %v1180, %v1178
    %v1215 = vpack.c.b16 %v1183, %v1181
    %v1216 = vpack.c.b16 %v1184, %v1182
    %1249 = vmatprep.subr.bf16.mxu0 %v1200
    %1250 = vmatpush1.bf16.msra.mxu0 %v1199
    %1251 = vmatprep.subr.bf16.mxu0 %v1198
    %1252 = vmatpush1.bf16.msra.mxu0 %v1197
    %1253 = vmatprep.subr.bf16.mxu0 %v1196
    %1254 = vmatpush1.bf16.msra.mxu0 %v1195
    %1255 = vmatprep.subr.bf16.mxu0 %v1194
    %1256 = vmatpush1.bf16.msra.mxu0 %v1193
    %1257 = vmatprep.subr.bf16.mxu0 %v1192
    %1258 = vmatpush1.bf16.msra.mxu0 %v1191
    %1259 = vmatprep.subr.bf16.mxu0 %v1190
    %1260 = vmatpush1.bf16.msra.mxu0 %v1189
    %1261 = vmatprep.subr.bf16.mxu0 %v1188
    %1262 = vmatpush1.bf16.msra.mxu0 %v1187
    %1263 = vmatprep.subr.bf16.mxu0 %v1186
    %1264 = vmatpush1.bf16.msra.mxu0 %v1185
    %1265 = vmatprep.subr.bf16.mxu0 %v1216
    %1266 = vmatpush2.bf16.msra.mxu0 %v1215
    %1267 = vmatprep.subr.bf16.mxu0 %v1214
    %1268 = vmatpush2.bf16.msra.mxu0 %v1213
    %1269 = vmatprep.subr.bf16.mxu0 %v1212
    %1270 = vmatpush2.bf16.msra.mxu0 %v1211
    %1271 = vmatprep.subr.bf16.mxu0 %v1210
    %1272 = vmatpush2.bf16.msra.mxu0 %v1209
    %1273 = vmatprep.subr.bf16.mxu0 %v1208
    %1274 = vmatpush2.bf16.msra.mxu0 %v1207
    %1275 = vmatprep.subr.bf16.mxu0 %v1206
    %1276 = vmatpush2.bf16.msra.mxu0 %v1205
    %1277 = vmatprep.subr.bf16.mxu0 %v1204
    %1278 = vmatpush2.bf16.msra.mxu0 %v1203
    %1279 = vmatprep.subr.bf16.mxu0 %v1202
    %1280 = vmatpush2.bf16.msra.mxu0 %v1201
    %1281 = vmatprep.mubr.bf16.mxu0 %v1044
    %1282 = vmatmul.mubr.bf16.gmra.mxu0 %v1043
    %v1283 = vpop.f32.mrf.mxu0
    %v1284 = vadd.f32 %v1082, %v1283
    %v1285 = vpop.f32.mrf.mxu0
    %v1286 = vadd.f32 %v1086, %v1285
    %v1287 = vpop.f32.mrf.mxu0
    %v1288 = vpop.f32.mrf.mxu0
    %1289 = vdwg.mxu0
    %1290 = vst [vmem:[%s10] sm:$0xff] %v1284
    %1291 = vst [vmem:[%s11] sm:$0xff] %v1286
    %v1292 = vmul.f32 %v1286, 0.5
    %v1293 = vmul.f32 %v1292, 1.442695
    %v1294 = vpow.pop %v1293
    %v1295 = vld [vmem:[%s9] sm:$0xff]
    %v1296 = vmul.f32 %v1294, %v1295
    %v1297 = vadd.f32 %v1284, %v1296
    %1298 = vst [vmem:[%s12] sm:$0xff] %v1297
    %v1299 = vpack.c.bf16 %v1297, %v1297
    %v1300 = vld [vmem:[%s5] sm:$0xff]
    %v1301 = vld [vmem:[%s5 + $0x8] sm:$0xff]
    %v1302 = vld [vmem:[%s5 + $0x10] sm:$0xff]
    %v1303 = vld [vmem:[%s5 + $0x18] sm:$0xff]
    %v1304 = vld [vmem:[%s5 + $0x20] sm:$0xff]
    %v1305 = vld [vmem:[%s5 + $0x28] sm:$0xff]
    %v1306 = vld [vmem:[%s5 + $0x30] sm:$0xff]
    %v1307 = vld [vmem:[%s5 + $0x38] sm:$0xff]
    %v1308 = vld [vmem:[%s5 + $0x40] sm:$0xff]
    %v1309 = vld [vmem:[%s5 + $0x48] sm:$0xff]
    %v1310 = vld [vmem:[%s5 + $0x50] sm:$0xff]
    %v1311 = vld [vmem:[%s5 + $0x58] sm:$0xff]
    %v1312 = vld [vmem:[%s5 + $0x60] sm:$0xff]
    %v1313 = vld [vmem:[%s5 + $0x68] sm:$0xff]
    %v1314 = vld [vmem:[%s5 + $0x70] sm:$0xff]
    %v1315 = vld [vmem:[%s5 + $0x78] sm:$0xff]
    %v1316 = vld [vmem:[%s6] sm:$0x3]
    %v1318 = vlaneseq
    %v1319 = vshrl.u32 %v1318, 7
    %v1320 = vsub.s32 0, %v1319
    %v1321 = vrot.slane %v1316, %v1320
    %v1322 = vlaneseq
    %v1323 = vshrl.u32 %v1322, 7
    %v1324 = vsub.s32 1, %v1323
    %v1325 = vrot.slane %v1316, %v1324
    %v1344 = vunpack.c.l.b16 %v1300
    %v1345 = vunpack.c.h.b16 %v1300
    %v1346 = vunpack.c.l.b16 %v1301
    %v1347 = vunpack.c.h.b16 %v1301
    %v1348 = vunpack.c.l.b16 %v1302
    %v1349 = vunpack.c.h.b16 %v1302
    %v1350 = vunpack.c.l.b16 %v1303
    %v1351 = vunpack.c.h.b16 %v1303
    %v1352 = vunpack.c.l.b16 %v1304
    %v1353 = vunpack.c.h.b16 %v1304
    %v1354 = vunpack.c.l.b16 %v1305
    %v1355 = vunpack.c.h.b16 %v1305
    %v1356 = vunpack.c.l.b16 %v1306
    %v1357 = vunpack.c.h.b16 %v1306
    %v1358 = vunpack.c.l.b16 %v1307
    %v1359 = vunpack.c.h.b16 %v1307
    %v1360 = vunpack.c.l.b16 %v1308
    %v1361 = vunpack.c.h.b16 %v1308
    %v1362 = vunpack.c.l.b16 %v1309
    %v1363 = vunpack.c.h.b16 %v1309
    %v1364 = vunpack.c.l.b16 %v1310
    %v1365 = vunpack.c.h.b16 %v1310
    %v1366 = vunpack.c.l.b16 %v1311
    %v1367 = vunpack.c.h.b16 %v1311
    %v1368 = vunpack.c.l.b16 %v1312
    %v1369 = vunpack.c.h.b16 %v1312
    %v1370 = vunpack.c.l.b16 %v1313
    %v1371 = vunpack.c.h.b16 %v1313
    %v1372 = vunpack.c.l.b16 %v1314
    %v1373 = vunpack.c.h.b16 %v1314
    %v1374 = vunpack.c.l.b16 %v1315
    %v1375 = vunpack.c.h.b16 %v1315
    %v1376 = vpack.c.b16 %v1346, %v1344
    %v1377 = vpack.c.b16 %v1347, %v1345
    %v1378 = vpack.c.b16 %v1350, %v1348
    %v1379 = vpack.c.b16 %v1351, %v1349
    %v1380 = vpack.c.b16 %v1354, %v1352
    %v1381 = vpack.c.b16 %v1355, %v1353
    %v1382 = vpack.c.b16 %v1358, %v1356
    %v1383 = vpack.c.b16 %v1359, %v1357
    %v1384 = vpack.c.b16 %v1362, %v1360
    %v1385 = vpack.c.b16 %v1363, %v1361
    %v1386 = vpack.c.b16 %v1366, %v1364
    %v1387 = vpack.c.b16 %v1367, %v1365
    %v1388 = vpack.c.b16 %v1370, %v1368
    %v1389 = vpack.c.b16 %v1371, %v1369
    %v1390 = vpack.c.b16 %v1374, %v1372
    %v1391 = vpack.c.b16 %v1375, %v1373
    %1408 = vmatprep.subr.bf16.mxu0 %v1391
    %1409 = vmatpush1.bf16.msra.mxu0 %v1390
    %1410 = vmatprep.subr.bf16.mxu0 %v1389
    %1411 = vmatpush1.bf16.msra.mxu0 %v1388
    %1412 = vmatprep.subr.bf16.mxu0 %v1387
    %1413 = vmatpush1.bf16.msra.mxu0 %v1386
    %1414 = vmatprep.subr.bf16.mxu0 %v1385
    %1415 = vmatpush1.bf16.msra.mxu0 %v1384
    %1416 = vmatprep.subr.bf16.mxu0 %v1383
    %1417 = vmatpush1.bf16.msra.mxu0 %v1382
    %1418 = vmatprep.subr.bf16.mxu0 %v1381
    %1419 = vmatpush1.bf16.msra.mxu0 %v1380
    %1420 = vmatprep.subr.bf16.mxu0 %v1379
    %1421 = vmatpush1.bf16.msra.mxu0 %v1378
    %1422 = vmatprep.subr.bf16.mxu0 %v1377
    %1423 = vmatpush1.bf16.msra.mxu0 %v1376
    %1424 = vmatprep.subr.bf16.mxu0 0
    %1425 = vmatpush2.bf16.msra.mxu0 0
    %1426 = vmatprep.subr.bf16.mxu0 0
    %1427 = vmatpush2.bf16.msra.mxu0 0
    %1428 = vmatprep.subr.bf16.mxu0 0
    %1429 = vmatpush2.bf16.msra.mxu0 0
    %1430 = vmatprep.subr.bf16.mxu0 0
    %1431 = vmatpush2.bf16.msra.mxu0 0
    %1432 = vmatprep.subr.bf16.mxu0 0
    %1433 = vmatpush2.bf16.msra.mxu0 0
    %1434 = vmatprep.subr.bf16.mxu0 0
    %1435 = vmatpush2.bf16.msra.mxu0 0
    %1436 = vmatprep.subr.bf16.mxu0 0
    %1437 = vmatpush2.bf16.msra.mxu0 0
    %1438 = vmatprep.subr.bf16.mxu0 0
    %1439 = vmatpush2.bf16.msra.mxu0 0
    %1440 = vmatprep.mubr.bf16.mxu0 0
    %1441 = vmatmul.mubr.bf16.gmra.mxu0 %v1299
    %v1442 = vpop.f32.mrf.mxu0
    %v1443 = vadd.f32 %v1321, %v1442
    %v1444 = vpop.f32.mrf.mxu0
    %v1445 = vadd.f32 %v1325, %v1444
    %v1446 = vpop.f32.mrf.mxu0
    %v1447 = vpop.f32.mrf.mxu0
    %1448 = vdwg.mxu0
    %v1449 = vmax.f32 %v1443, 0.0
    %v1450 = vmax.f32 %v1445, 0.0
    %v1451 = vpack.c.bf16 %v1449, %v1449
    %v1452 = vpack.c.bf16 %v1450, %v1450
    %v1453 = vld [vmem:[#allocation6] sm:$0xff]
    %v1454 = vld [vmem:[#allocation6 + $0x8] sm:$0xff]
    %v1455 = vld [vmem:[#allocation6 + $0x10] sm:$0xff]
    %v1456 = vld [vmem:[#allocation6 + $0x18] sm:$0xff]
    %v1457 = vld [vmem:[#allocation6 + $0x20] sm:$0xff]
    %v1458 = vld [vmem:[#allocation6 + $0x28] sm:$0xff]
    %v1459 = vld [vmem:[#allocation6 + $0x30] sm:$0xff]
    %v1460 = vld [vmem:[#allocation6 + $0x38] sm:$0xff]
    %v1461 = vld [vmem:[#allocation6 + $0x40] sm:$0xff]
    %v1462 = vld [vmem:[#allocation6 + $0x48] sm:$0xff]
    %v1463 = vld [vmem:[#allocation6 + $0x50] sm:$0xff]
    %v1464 = vld [vmem:[#allocation6 + $0x58] sm:$0xff]
    %v1465 = vld [vmem:[#allocation6 + $0x60] sm:$0xff]
    %v1466 = vld [vmem:[#allocation6 + $0x68] sm:$0xff]
    %v1467 = vld [vmem:[#allocation6 + $0x70] sm:$0xff]
    %v1468 = vld [vmem:[#allocation6 + $0x78] sm:$0xff]
    %v1469 = vld [vmem:[#allocation6 + $0x80] sm:$0xff]
    %v1470 = vld [vmem:[#allocation6 + $0x88] sm:$0xff]
    %v1471 = vld [vmem:[#allocation6 + $0x90] sm:$0xff]
    %v1472 = vld [vmem:[#allocation6 + $0x98] sm:$0xff]
    %v1473 = vld [vmem:[#allocation6 + $0xa0] sm:$0xff]
    %v1474 = vld [vmem:[#allocation6 + $0xa8] sm:$0xff]
    %v1475 = vld [vmem:[#allocation6 + $0xb0] sm:$0xff]
    %v1476 = vld [vmem:[#allocation6 + $0xb8] sm:$0xff]
    %v1477 = vld [vmem:[#allocation6 + $0xc0] sm:$0xff]
    %v1478 = vld [vmem:[#allocation6 + $0xc8] sm:$0xff]
    %v1479 = vld [vmem:[#allocation6 + $0xd0] sm:$0xff]
    %v1480 = vld [vmem:[#allocation6 + $0xd8] sm:$0xff]
    %v1481 = vld [vmem:[#allocation6 + $0xe0] sm:$0xff]
    %v1482 = vld [vmem:[#allocation6 + $0xe8] sm:$0xff]
    %v1483 = vld [vmem:[#allocation6 + $0xf0] sm:$0xff]
    %v1484 = vld [vmem:[#allocation6 + $0xf8] sm:$0xff]
    %v1485 = vld [vmem:[#allocation6 + $0x100] sm:$0xff]
    %v1486 = vld [vmem:[#allocation6 + $0x108] sm:$0xff]
    %v1487 = vld [vmem:[#allocation6 + $0x110] sm:$0xff]
    %v1488 = vld [vmem:[#allocation6 + $0x118] sm:$0xff]
    %v1489 = vld [vmem:[#allocation6 + $0x120] sm:$0xff]
    %v1490 = vld [vmem:[#allocation6 + $0x128] sm:$0xff]
    %v1491 = vld [vmem:[#allocation6 + $0x130] sm:$0xff]
    %v1492 = vld [vmem:[#allocation6 + $0x138] sm:$0xff]
    %v1493 = vld [vmem:[#allocation6 + $0x140] sm:$0xff]
    %v1494 = vld [vmem:[#allocation6 + $0x148] sm:$0xff]
    %v1495 = vld [vmem:[#allocation6 + $0x150] sm:$0xff]
    %v1496 = vld [vmem:[#allocation6 + $0x158] sm:$0xff]
    %v1497 = vld [vmem:[#allocation6 + $0x160] sm:$0xff]
    %v1498 = vld [vmem:[#allocation6 + $0x168] sm:$0xff]
    %v1499 = vld [vmem:[#allocation6 + $0x170] sm:$0xff]
    %v1500 = vld [vmem:[#allocation6 + $0x178] sm:$0xff]
    %v1501 = vld [vmem:[#allocation6 + $0x180] sm:$0xff]
    %v1502 = vld [vmem:[#allocation6 + $0x188] sm:$0xff]
    %v1503 = vld [vmem:[#allocation6 + $0x190] sm:$0xff]
    %v1504 = vld [vmem:[#allocation6 + $0x198] sm:$0xff]
    %v1505 = vld [vmem:[#allocation6 + $0x1a0] sm:$0xff]
    %v1506 = vld [vmem:[#allocation6 + $0x1a8] sm:$0xff]
    %v1507 = vld [vmem:[#allocation6 + $0x1b0] sm:$0xff]
    %v1508 = vld [vmem:[#allocation6 + $0x1b8] sm:$0xff]
    %v1509 = vld [vmem:[#allocation6 + $0x1c0] sm:$0xff]
    %v1510 = vld [vmem:[#allocation6 + $0x1c8] sm:$0xff]
    %v1511 = vld [vmem:[#allocation6 + $0x1d0] sm:$0xff]
    %v1512 = vld [vmem:[#allocation6 + $0x1d8] sm:$0xff]
    %v1513 = vld [vmem:[#allocation6 + $0x1e0] sm:$0xff]
    %v1514 = vld [vmem:[#allocation6 + $0x1e8] sm:$0xff]
    %v1515 = vld [vmem:[#allocation6 + $0x1f0] sm:$0xff]
    %v1516 = vld [vmem:[#allocation6 + $0x1f8] sm:$0xff]
    %v1517 = vld [vmem:[#allocation6 + $0x200] sm:$0xff]
    %v1518 = vld [vmem:[#allocation6 + $0x208] sm:$0xff]
    %v1519 = vld [vmem:[#allocation6 + $0x210] sm:$0xff]
    %v1520 = vld [vmem:[#allocation6 + $0x218] sm:$0xff]
    %v1521 = vld [vmem:[#allocation6 + $0x220] sm:$0xff]
    %v1522 = vld [vmem:[#allocation6 + $0x228] sm:$0xff]
    %v1523 = vld [vmem:[#allocation6 + $0x230] sm:$0xff]
    %v1524 = vld [vmem:[#allocation6 + $0x238] sm:$0xff]
    %v1525 = vld [vmem:[#allocation6 + $0x240] sm:$0xff]
    %v1526 = vld [vmem:[#allocation6 + $0x248] sm:$0xff]
    %v1527 = vld [vmem:[#allocation6 + $0x250] sm:$0xff]
    %v1528 = vld [vmem:[#allocation6 + $0x258] sm:$0xff]
    %v1529 = vld [vmem:[#allocation6 + $0x260] sm:$0xff]
    %v1530 = vld [vmem:[#allocation6 + $0x268] sm:$0xff]
    %v1531 = vld [vmem:[#allocation6 + $0x270] sm:$0xff]
    %v1532 = vld [vmem:[#allocation6 + $0x278] sm:$0xff]
    %v1533 = vld [vmem:[#allocation6 + $0x280] sm:$0xff]
    %v1534 = vld [vmem:[#allocation6 + $0x288] sm:$0xff]
    %v1535 = vld [vmem:[#allocation6 + $0x290] sm:$0xff]
    %v1536 = vld [vmem:[#allocation6 + $0x298] sm:$0xff]
    %v1537 = vld [vmem:[#allocation6 + $0x2a0] sm:$0xff]
    %v1538 = vld [vmem:[#allocation6 + $0x2a8] sm:$0xff]
    %v1539 = vld [vmem:[#allocation6 + $0x2b0] sm:$0xff]
    %v1540 = vld [vmem:[#allocation6 + $0x2b8] sm:$0xff]
    %v1541 = vld [vmem:[#allocation6 + $0x2c0] sm:$0xff]
    %v1542 = vld [vmem:[#allocation6 + $0x2c8] sm:$0xff]
    %v1543 = vld [vmem:[#allocation6 + $0x2d0] sm:$0xff]
    %v1544 = vld [vmem:[#allocation6 + $0x2d8] sm:$0xff]
    %v1545 = vld [vmem:[#allocation6 + $0x2e0] sm:$0xff]
    %v1546 = vld [vmem:[#allocation6 + $0x2e8] sm:$0xff]
    %v1547 = vld [vmem:[#allocation6 + $0x2f0] sm:$0xff]
    %v1548 = vld [vmem:[#allocation6 + $0x2f8] sm:$0xff]
    %v1549 = vld [vmem:[#allocation6 + $0x300] sm:$0xff]
    %v1550 = vld [vmem:[#allocation6 + $0x308] sm:$0xff]
    %v1551 = vld [vmem:[#allocation6 + $0x310] sm:$0xff]
    %v1552 = vld [vmem:[#allocation6 + $0x318] sm:$0xff]
    %v1553 = vld [vmem:[#allocation6 + $0x320] sm:$0xff]
    %v1554 = vld [vmem:[#allocation6 + $0x328] sm:$0xff]
    %v1555 = vld [vmem:[#allocation6 + $0x330] sm:$0xff]
    %v1556 = vld [vmem:[#allocation6 + $0x338] sm:$0xff]
    %v1557 = vld [vmem:[#allocation6 + $0x340] sm:$0xff]
    %v1558 = vld [vmem:[#allocation6 + $0x348] sm:$0xff]
    %v1559 = vld [vmem:[#allocation6 + $0x350] sm:$0xff]
    %v1560 = vld [vmem:[#allocation6 + $0x358] sm:$0xff]
    %v1561 = vld [vmem:[#allocation6 + $0x360] sm:$0xff]
    %v1562 = vld [vmem:[#allocation6 + $0x368] sm:$0xff]
    %v1563 = vld [vmem:[#allocation6 + $0x370] sm:$0xff]
    %v1564 = vld [vmem:[#allocation6 + $0x378] sm:$0xff]
    %v1565 = vld [vmem:[#allocation6 + $0x380] sm:$0xff]
    %v1566 = vld [vmem:[#allocation6 + $0x388] sm:$0xff]
    %v1567 = vld [vmem:[#allocation6 + $0x390] sm:$0xff]
    %v1568 = vld [vmem:[#allocation6 + $0x398] sm:$0xff]
    %v1569 = vld [vmem:[#allocation6 + $0x3a0] sm:$0xff]
    %v1570 = vld [vmem:[#allocation6 + $0x3a8] sm:$0xff]
    %v1571 = vld [vmem:[#allocation6 + $0x3b0] sm:$0xff]
    %v1572 = vld [vmem:[#allocation6 + $0x3b8] sm:$0xff]
    %v1573 = vld [vmem:[#allocation6 + $0x3c0] sm:$0xff]
    %v1574 = vld [vmem:[#allocation6 + $0x3c8] sm:$0xff]
    %v1575 = vld [vmem:[#allocation6 + $0x3d0] sm:$0xff]
    %v1576 = vld [vmem:[#allocation6 + $0x3d8] sm:$0xff]
    %v1577 = vld [vmem:[#allocation6 + $0x3e0] sm:$0xff]
    %v1578 = vld [vmem:[#allocation6 + $0x3e8] sm:$0xff]
    %v1579 = vld [vmem:[#allocation6 + $0x3f0] sm:$0xff]
    %v1580 = vld [vmem:[#allocation6 + $0x3f8] sm:$0xff]
    %v1581 = vld [vmem:[%s8] sm:$0xff]
    %v1583 = vlaneseq
    %v1584 = vshrl.u32 %v1583, 7
    %v1585 = vsub.s32 0, %v1584
    %v1586 = vrot.slane %v1581, %v1585
    %v1587 = vlaneseq
    %v1588 = vshrl.u32 %v1587, 7
    %v1589 = vsub.s32 1, %v1588
    %v1590 = vrot.slane %v1581, %v1589
    %v1591 = vlaneseq
    %v1592 = vshrl.u32 %v1591, 7
    %v1593 = vsub.s32 2, %v1592
    %v1594 = vrot.slane %v1581, %v1593
    %v1595 = vlaneseq
    %v1596 = vshrl.u32 %v1595, 7
    %v1597 = vsub.s32 3, %v1596
    %v1598 = vrot.slane %v1581, %v1597
    %v1599 = vlaneseq
    %v1600 = vshrl.u32 %v1599, 7
    %v1601 = vsub.s32 4, %v1600
    %v1602 = vrot.slane %v1581, %v1601
    %v1603 = vlaneseq
    %v1604 = vshrl.u32 %v1603, 7
    %v1605 = vsub.s32 5, %v1604
    %v1606 = vrot.slane %v1581, %v1605
    %v1607 = vlaneseq
    %v1608 = vshrl.u32 %v1607, 7
    %v1609 = vsub.s32 6, %v1608
    %v1610 = vrot.slane %v1581, %v1609
    %v1611 = vlaneseq
    %v1612 = vshrl.u32 %v1611, 7
    %v1613 = vsub.s32 7, %v1612
    %v1614 = vrot.slane %v1581, %v1613
    %v1751 = vunpack.c.l.b16 %v1453
    %v1752 = vunpack.c.h.b16 %v1453
    %v1753 = vunpack.c.l.b16 %v1454
    %v1754 = vunpack.c.h.b16 %v1454
    %v1755 = vunpack.c.l.b16 %v1455
    %v1756 = vunpack.c.h.b16 %v1455
    %v1757 = vunpack.c.l.b16 %v1456
    %v1758 = vunpack.c.h.b16 %v1456
    %v1759 = vunpack.c.l.b16 %v1457
    %v1760 = vunpack.c.h.b16 %v1457
    %v1761 = vunpack.c.l.b16 %v1458
    %v1762 = vunpack.c.h.b16 %v1458
    %v1763 = vunpack.c.l.b16 %v1459
    %v1764 = vunpack.c.h.b16 %v1459
    %v1765 = vunpack.c.l.b16 %v1460
    %v1766 = vunpack.c.h.b16 %v1460
    %v1767 = vunpack.c.l.b16 %v1461
    %v1768 = vunpack.c.h.b16 %v1461
    %v1769 = vunpack.c.l.b16 %v1462
    %v1770 = vunpack.c.h.b16 %v1462
    %v1771 = vunpack.c.l.b16 %v1463
    %v1772 = vunpack.c.h.b16 %v1463
    %v1773 = vunpack.c.l.b16 %v1464
    %v1774 = vunpack.c.h.b16 %v1464
    %v1775 = vunpack.c.l.b16 %v1465
    %v1776 = vunpack.c.h.b16 %v1465
    %v1777 = vunpack.c.l.b16 %v1466
    %v1778 = vunpack.c.h.b16 %v1466
    %v1779 = vunpack.c.l.b16 %v1467
    %v1780 = vunpack.c.h.b16 %v1467
    %v1781 = vunpack.c.l.b16 %v1468
    %v1782 = vunpack.c.h.b16 %v1468
    %v1783 = vunpack.c.l.b16 %v1469
    %v1784 = vunpack.c.h.b16 %v1469
    %v1785 = vunpack.c.l.b16 %v1470
    %v1786 = vunpack.c.h.b16 %v1470
    %v1787 = vunpack.c.l.b16 %v1471
    %v1788 = vunpack.c.h.b16 %v1471
    %v1789 = vunpack.c.l.b16 %v1472
    %v1790 = vunpack.c.h.b16 %v1472
    %v1791 = vunpack.c.l.b16 %v1473
    %v1792 = vunpack.c.h.b16 %v1473
    %v1793 = vunpack.c.l.b16 %v1474
    %v1794 = vunpack.c.h.b16 %v1474
    %v1795 = vunpack.c.l.b16 %v1475
    %v1796 = vunpack.c.h.b16 %v1475
    %v1797 = vunpack.c.l.b16 %v1476
    %v1798 = vunpack.c.h.b16 %v1476
    %v1799 = vunpack.c.l.b16 %v1477
    %v1800 = vunpack.c.h.b16 %v1477
    %v1801 = vunpack.c.l.b16 %v1478
    %v1802 = vunpack.c.h.b16 %v1478
    %v1803 = vunpack.c.l.b16 %v1479
    %v1804 = vunpack.c.h.b16 %v1479
    %v1805 = vunpack.c.l.b16 %v1480
    %v1806 = vunpack.c.h.b16 %v1480
    %v1807 = vunpack.c.l.b16 %v1481
    %v1808 = vunpack.c.h.b16 %v1481
    %v1809 = vunpack.c.l.b16 %v1482
    %v1810 = vunpack.c.h.b16 %v1482
    %v1811 = vunpack.c.l.b16 %v1483
    %v1812 = vunpack.c.h.b16 %v1483
    %v1813 = vunpack.c.l.b16 %v1484
    %v1814 = vunpack.c.h.b16 %v1484
    %v1815 = vunpack.c.l.b16 %v1485
    %v1816 = vunpack.c.h.b16 %v1485
    %v1817 = vunpack.c.l.b16 %v1486
    %v1818 = vunpack.c.h.b16 %v1486
    %v1819 = vunpack.c.l.b16 %v1487
    %v1820 = vunpack.c.h.b16 %v1487
    %v1821 = vunpack.c.l.b16 %v1488
    %v1822 = vunpack.c.h.b16 %v1488
    %v1823 = vunpack.c.l.b16 %v1489
    %v1824 = vunpack.c.h.b16 %v1489
    %v1825 = vunpack.c.l.b16 %v1490
    %v1826 = vunpack.c.h.b16 %v1490
    %v1827 = vunpack.c.l.b16 %v1491
    %v1828 = vunpack.c.h.b16 %v1491
    %v1829 = vunpack.c.l.b16 %v1492
    %v1830 = vunpack.c.h.b16 %v1492
    %v1831 = vunpack.c.l.b16 %v1493
    %v1832 = vunpack.c.h.b16 %v1493
    %v1833 = vunpack.c.l.b16 %v1494
    %v1834 = vunpack.c.h.b16 %v1494
    %v1835 = vunpack.c.l.b16 %v1495
    %v1836 = vunpack.c.h.b16 %v1495
    %v1837 = vunpack.c.l.b16 %v1496
    %v1838 = vunpack.c.h.b16 %v1496
    %v1839 = vunpack.c.l.b16 %v1497
    %v1840 = vunpack.c.h.b16 %v1497
    %v1841 = vunpack.c.l.b16 %v1498
    %v1842 = vunpack.c.h.b16 %v1498
    %v1843 = vunpack.c.l.b16 %v1499
    %v1844 = vunpack.c.h.b16 %v1499
    %v1845 = vunpack.c.l.b16 %v1500
    %v1846 = vunpack.c.h.b16 %v1500
    %v1847 = vunpack.c.l.b16 %v1501
    %v1848 = vunpack.c.h.b16 %v1501
    %v1849 = vunpack.c.l.b16 %v1502
    %v1850 = vunpack.c.h.b16 %v1502
    %v1851 = vunpack.c.l.b16 %v1503
    %v1852 = vunpack.c.h.b16 %v1503
    %v1853 = vunpack.c.l.b16 %v1504
    %v1854 = vunpack.c.h.b16 %v1504
    %v1855 = vunpack.c.l.b16 %v1505
    %v1856 = vunpack.c.h.b16 %v1505
    %v1857 = vunpack.c.l.b16 %v1506
    %v1858 = vunpack.c.h.b16 %v1506
    %v1859 = vunpack.c.l.b16 %v1507
    %v1860 = vunpack.c.h.b16 %v1507
    %v1861 = vunpack.c.l.b16 %v1508
    %v1862 = vunpack.c.h.b16 %v1508
    %v1863 = vunpack.c.l.b16 %v1509
    %v1864 = vunpack.c.h.b16 %v1509
    %v1865 = vunpack.c.l.b16 %v1510
    %v1866 = vunpack.c.h.b16 %v1510
    %v1867 = vunpack.c.l.b16 %v1511
    %v1868 = vunpack.c.h.b16 %v1511
    %v1869 = vunpack.c.l.b16 %v1512
    %v1870 = vunpack.c.h.b16 %v1512
    %v1871 = vunpack.c.l.b16 %v1513
    %v1872 = vunpack.c.h.b16 %v1513
    %v1873 = vunpack.c.l.b16 %v1514
    %v1874 = vunpack.c.h.b16 %v1514
    %v1875 = vunpack.c.l.b16 %v1515
    %v1876 = vunpack.c.h.b16 %v1515
    %v1877 = vunpack.c.l.b16 %v1516
    %v1878 = vunpack.c.h.b16 %v1516
    %v1879 = vunpack.c.l.b16 %v1517
    %v1880 = vunpack.c.h.b16 %v1517
    %v1881 = vunpack.c.l.b16 %v1518
    %v1882 = vunpack.c.h.b16 %v1518
    %v1883 = vunpack.c.l.b16 %v1519
    %v1884 = vunpack.c.h.b16 %v1519
    %v1885 = vunpack.c.l.b16 %v1520
    %v1886 = vunpack.c.h.b16 %v1520
    %v1887 = vunpack.c.l.b16 %v1521
    %v1888 = vunpack.c.h.b16 %v1521
    %v1889 = vunpack.c.l.b16 %v1522
    %v1890 = vunpack.c.h.b16 %v1522
    %v1891 = vunpack.c.l.b16 %v1523
    %v1892 = vunpack.c.h.b16 %v1523
    %v1893 = vunpack.c.l.b16 %v1524
    %v1894 = vunpack.c.h.b16 %v1524
    %v1895 = vunpack.c.l.b16 %v1525
    %v1896 = vunpack.c.h.b16 %v1525
    %v1897 = vunpack.c.l.b16 %v1526
    %v1898 = vunpack.c.h.b16 %v1526
    %v1899 = vunpack.c.l.b16 %v1527
    %v1900 = vunpack.c.h.b16 %v1527
    %v1901 = vunpack.c.l.b16 %v1528
    %v1902 = vunpack.c.h.b16 %v1528
    %v1903 = vunpack.c.l.b16 %v1529
    %v1904 = vunpack.c.h.b16 %v1529
    %v1905 = vunpack.c.l.b16 %v1530
    %v1906 = vunpack.c.h.b16 %v1530
    %v1907 = vunpack.c.l.b16 %v1531
    %v1908 = vunpack.c.h.b16 %v1531
    %v1909 = vunpack.c.l.b16 %v1532
    %v1910 = vunpack.c.h.b16 %v1532
    %v1911 = vunpack.c.l.b16 %v1533
    %v1912 = vunpack.c.h.b16 %v1533
    %v1913 = vunpack.c.l.b16 %v1534
    %v1914 = vunpack.c.h.b16 %v1534
    %v1915 = vunpack.c.l.b16 %v1535
    %v1916 = vunpack.c.h.b16 %v1535
    %v1917 = vunpack.c.l.b16 %v1536
    %v1918 = vunpack.c.h.b16 %v1536
    %v1919 = vunpack.c.l.b16 %v1537
    %v1920 = vunpack.c.h.b16 %v1537
    %v1921 = vunpack.c.l.b16 %v1538
    %v1922 = vunpack.c.h.b16 %v1538
    %v1923 = vunpack.c.l.b16 %v1539
    %v1924 = vunpack.c.h.b16 %v1539
    %v1925 = vunpack.c.l.b16 %v1540
    %v1926 = vunpack.c.h.b16 %v1540
    %v1927 = vunpack.c.l.b16 %v1541
    %v1928 = vunpack.c.h.b16 %v1541
    %v1929 = vunpack.c.l.b16 %v1542
    %v1930 = vunpack.c.h.b16 %v1542
    %v1931 = vunpack.c.l.b16 %v1543
    %v1932 = vunpack.c.h.b16 %v1543
    %v1933 = vunpack.c.l.b16 %v1544
    %v1934 = vunpack.c.h.b16 %v1544
    %v1935 = vunpack.c.l.b16 %v1545
    %v1936 = vunpack.c.h.b16 %v1545
    %v1937 = vunpack.c.l.b16 %v1546
    %v1938 = vunpack.c.h.b16 %v1546
    %v1939 = vunpack.c.l.b16 %v1547
    %v1940 = vunpack.c.h.b16 %v1547
    %v1941 = vunpack.c.l.b16 %v1548
    %v1942 = vunpack.c.h.b16 %v1548
    %v1943 = vunpack.c.l.b16 %v1549
    %v1944 = vunpack.c.h.b16 %v1549
    %v1945 = vunpack.c.l.b16 %v1550
    %v1946 = vunpack.c.h.b16 %v1550
    %v1947 = vunpack.c.l.b16 %v1551
    %v1948 = vunpack.c.h.b16 %v1551
    %v1949 = vunpack.c.l.b16 %v1552
    %v1950 = vunpack.c.h.b16 %v1552
    %v1951 = vunpack.c.l.b16 %v1553
    %v1952 = vunpack.c.h.b16 %v1553
    %v1953 = vunpack.c.l.b16 %v1554
    %v1954 = vunpack.c.h.b16 %v1554
    %v1955 = vunpack.c.l.b16 %v1555
    %v1956 = vunpack.c.h.b16 %v1555
    %v1957 = vunpack.c.l.b16 %v1556
    %v1958 = vunpack.c.h.b16 %v1556
    %v1959 = vunpack.c.l.b16 %v1557
    %v1960 = vunpack.c.h.b16 %v1557
    %v1961 = vunpack.c.l.b16 %v1558
    %v1962 = vunpack.c.h.b16 %v1558
    %v1963 = vunpack.c.l.b16 %v1559
    %v1964 = vunpack.c.h.b16 %v1559
    %v1965 = vunpack.c.l.b16 %v1560
    %v1966 = vunpack.c.h.b16 %v1560
    %v1967 = vunpack.c.l.b16 %v1561
    %v1968 = vunpack.c.h.b16 %v1561
    %v1969 = vunpack.c.l.b16 %v1562
    %v1970 = vunpack.c.h.b16 %v1562
    %v1971 = vunpack.c.l.b16 %v1563
    %v1972 = vunpack.c.h.b16 %v1563
    %v1973 = vunpack.c.l.b16 %v1564
    %v1974 = vunpack.c.h.b16 %v1564
    %v1975 = vunpack.c.l.b16 %v1565
    %v1976 = vunpack.c.h.b16 %v1565
    %v1977 = vunpack.c.l.b16 %v1566
    %v1978 = vunpack.c.h.b16 %v1566
    %v1979 = vunpack.c.l.b16 %v1567
    %v1980 = vunpack.c.h.b16 %v1567
    %v1981 = vunpack.c.l.b16 %v1568
    %v1982 = vunpack.c.h.b16 %v1568
    %v1983 = vunpack.c.l.b16 %v1569
    %v1984 = vunpack.c.h.b16 %v1569
    %v1985 = vunpack.c.l.b16 %v1570
    %v1986 = vunpack.c.h.b16 %v1570
    %v1987 = vunpack.c.l.b16 %v1571
    %v1988 = vunpack.c.h.b16 %v1571
    %v1989 = vunpack.c.l.b16 %v1572
    %v1990 = vunpack.c.h.b16 %v1572
    %v1991 = vunpack.c.l.b16 %v1573
    %v1992 = vunpack.c.h.b16 %v1573
    %v1993 = vunpack.c.l.b16 %v1574
    %v1994 = vunpack.c.h.b16 %v1574
    %v1995 = vunpack.c.l.b16 %v1575
    %v1996 = vunpack.c.h.b16 %v1575
    %v1997 = vunpack.c.l.b16 %v1576
    %v1998 = vunpack.c.h.b16 %v1576
    %v1999 = vunpack.c.l.b16 %v1577
    %v2000 = vunpack.c.h.b16 %v1577
    %v2001 = vunpack.c.l.b16 %v1578
    %v2002 = vunpack.c.h.b16 %v1578
    %v2003 = vunpack.c.l.b16 %v1579
    %v2004 = vunpack.c.h.b16 %v1579
    %v2005 = vunpack.c.l.b16 %v1580
    %v2006 = vunpack.c.h.b16 %v1580
    %v2007 = vpack.c.b16 %v1759, %v1751
    %v2008 = vpack.c.b16 %v1760, %v1752
    %v2009 = vpack.c.b16 %v1761, %v1753
    %v2010 = vpack.c.b16 %v1762, %v1754
    %v2011 = vpack.c.b16 %v1763, %v1755
    %v2012 = vpack.c.b16 %v1764, %v1756
    %v2013 = vpack.c.b16 %v1765, %v1757
    %v2014 = vpack.c.b16 %v1766, %v1758
    %v2015 = vpack.c.b16 %v1775, %v1767
    %v2016 = vpack.c.b16 %v1776, %v1768
    %v2017 = vpack.c.b16 %v1777, %v1769
    %v2018 = vpack.c.b16 %v1778, %v1770
    %v2019 = vpack.c.b16 %v1779, %v1771
    %v2020 = vpack.c.b16 %v1780, %v1772
    %v2021 = vpack.c.b16 %v1781, %v1773
    %v2022 = vpack.c.b16 %v1782, %v1774
    %v2023 = vpack.c.b16 %v1791, %v1783
    %v2024 = vpack.c.b16 %v1792, %v1784
    %v2025 = vpack.c.b16 %v1793, %v1785
    %v2026 = vpack.c.b16 %v1794, %v1786
    %v2027 = vpack.c.b16 %v1795, %v1787
    %v2028 = vpack.c.b16 %v1796, %v1788
    %v2029 = vpack.c.b16 %v1797, %v1789
    %v2030 = vpack.c.b16 %v1798, %v1790
    %v2031 = vpack.c.b16 %v1807, %v1799
    %v2032 = vpack.c.b16 %v1808, %v1800
    %v2033 = vpack.c.b16 %v1809, %v1801
    %v2034 = vpack.c.b16 %v1810, %v1802
    %v2035 = vpack.c.b16 %v1811, %v1803
    %v2036 = vpack.c.b16 %v1812, %v1804
    %v2037 = vpack.c.b16 %v1813, %v1805
    %v2038 = vpack.c.b16 %v1814, %v1806
    %v2039 = vpack.c.b16 %v1823, %v1815
    %v2040 = vpack.c.b16 %v1824, %v1816
    %v2041 = vpack.c.b16 %v1825, %v1817
    %v2042 = vpack.c.b16 %v1826, %v1818
    %v2043 = vpack.c.b16 %v1827, %v1819
    %v2044 = vpack.c.b16 %v1828, %v1820
    %v2045 = vpack.c.b16 %v1829, %v1821
    %v2046 = vpack.c.b16 %v1830, %v1822
    %v2047 = vpack.c.b16 %v1839, %v1831
    %v2048 = vpack.c.b16 %v1840, %v1832
    %v2049 = vpack.c.b16 %v1841, %v1833
    %v2050 = vpack.c.b16 %v1842, %v1834
    %v2051 = vpack.c.b16 %v1843, %v1835
    %v2052 = vpack.c.b16 %v1844, %v1836
    %v2053 = vpack.c.b16 %v1845, %v1837
    %v2054 = vpack.c.b16 %v1846, %v1838
    %v2055 = vpack.c.b16 %v1855, %v1847
    %v2056 = vpack.c.b16 %v1856, %v1848
    %v2057 = vpack.c.b16 %v1857, %v1849
    %v2058 = vpack.c.b16 %v1858, %v1850
    %v2059 = vpack.c.b16 %v1859, %v1851
    %v2060 = vpack.c.b16 %v1860, %v1852
    %v2061 = vpack.c.b16 %v1861, %v1853
    %v2062 = vpack.c.b16 %v1862, %v1854
    %v2063 = vpack.c.b16 %v1871, %v1863
    %v2064 = vpack.c.b16 %v1872, %v1864
    %v2065 = vpack.c.b16 %v1873, %v1865
    %v2066 = vpack.c.b16 %v1874, %v1866
    %v2067 = vpack.c.b16 %v1875, %v1867
    %v2068 = vpack.c.b16 %v1876, %v1868
    %v2069 = vpack.c.b16 %v1877, %v1869
    %v2070 = vpack.c.b16 %v1878, %v1870
    %v2071 = vpack.c.b16 %v1887, %v1879
    %v2072 = vpack.c.b16 %v1888, %v1880
    %v2073 = vpack.c.b16 %v1889, %v1881
    %v2074 = vpack.c.b16 %v1890, %v1882
    %v2075 = vpack.c.b16 %v1891, %v1883
    %v2076 = vpack.c.b16 %v1892, %v1884
    %v2077 = vpack.c.b16 %v1893, %v1885
    %v2078 = vpack.c.b16 %v1894, %v1886
    %v2079 = vpack.c.b16 %v1903, %v1895
    %v2080 = vpack.c.b16 %v1904, %v1896
    %v2081 = vpack.c.b16 %v1905, %v1897
    %v2082 = vpack.c.b16 %v1906, %v1898
    %v2083 = vpack.c.b16 %v1907, %v1899
    %v2084 = vpack.c.b16 %v1908, %v1900
    %v2085 = vpack.c.b16 %v1909, %v1901
    %v2086 = vpack.c.b16 %v1910, %v1902
    %v2087 = vpack.c.b16 %v1919, %v1911
    %v2088 = vpack.c.b16 %v1920, %v1912
    %v2089 = vpack.c.b16 %v1921, %v1913
    %v2090 = vpack.c.b16 %v1922, %v1914
    %v2091 = vpack.c.b16 %v1923, %v1915
    %v2092 = vpack.c.b16 %v1924, %v1916
    %v2093 = vpack.c.b16 %v1925, %v1917
    %v2094 = vpack.c.b16 %v1926, %v1918
    %v2095 = vpack.c.b16 %v1935, %v1927
    %v2096 = vpack.c.b16 %v1936, %v1928
    %v2097 = vpack.c.b16 %v1937, %v1929
    %v2098 = vpack.c.b16 %v1938, %v1930
    %v2099 = vpack.c.b16 %v1939, %v1931
    %v2100 = vpack.c.b16 %v1940, %v1932
    %v2101 = vpack.c.b16 %v1941, %v1933
    %v2102 = vpack.c.b16 %v1942, %v1934
    %v2103 = vpack.c.b16 %v1951, %v1943
    %v2104 = vpack.c.b16 %v1952, %v1944
    %v2105 = vpack.c.b16 %v1953, %v1945
    %v2106 = vpack.c.b16 %v1954, %v1946
    %v2107 = vpack.c.b16 %v1955, %v1947
    %v2108 = vpack.c.b16 %v1956, %v1948
    %v2109 = vpack.c.b16 %v1957, %v1949
    %v2110 = vpack.c.b16 %v1958, %v1950
    %v2111 = vpack.c.b16 %v1967, %v1959
    %v2112 = vpack.c.b16 %v1968, %v1960
    %v2113 = vpack.c.b16 %v1969, %v1961
    %v2114 = vpack.c.b16 %v1970, %v1962
    %v2115 = vpack.c.b16 %v1971, %v1963
    %v2116 = vpack.c.b16 %v1972, %v1964
    %v2117 = vpack.c.b16 %v1973, %v1965
    %v2118 = vpack.c.b16 %v1974, %v1966
    %v2119 = vpack.c.b16 %v1983, %v1975
    %v2120 = vpack.c.b16 %v1984, %v1976
    %v2121 = vpack.c.b16 %v1985, %v1977
    %v2122 = vpack.c.b16 %v1986, %v1978
    %v2123 = vpack.c.b16 %v1987, %v1979
    %v2124 = vpack.c.b16 %v1988, %v1980
    %v2125 = vpack.c.b16 %v1989, %v1981
    %v2126 = vpack.c.b16 %v1990, %v1982
    %v2127 = vpack.c.b16 %v1999, %v1991
    %v2128 = vpack.c.b16 %v2000, %v1992
    %v2129 = vpack.c.b16 %v2001, %v1993
    %v2130 = vpack.c.b16 %v2002, %v1994
    %v2131 = vpack.c.b16 %v2003, %v1995
    %v2132 = vpack.c.b16 %v2004, %v1996
    %v2133 = vpack.c.b16 %v2005, %v1997
    %v2134 = vpack.c.b16 %v2006, %v1998
    %2263 = vmatprep.subr.bf16.mxu0 %v2064
    %2264 = vmatpush1.bf16.msra.mxu0 %v2063
    %2265 = vmatprep.subr.bf16.mxu0 %v2056
    %2266 = vmatpush1.bf16.msra.mxu0 %v2055
    %2267 = vmatprep.subr.bf16.mxu0 %v2048
    %2268 = vmatpush1.bf16.msra.mxu0 %v2047
    %2269 = vmatprep.subr.bf16.mxu0 %v2040
    %2270 = vmatpush1.bf16.msra.mxu0 %v2039
    %2271 = vmatprep.subr.bf16.mxu0 %v2032
    %2272 = vmatpush1.bf16.msra.mxu0 %v2031
    %2273 = vmatprep.subr.bf16.mxu0 %v2024
    %2274 = vmatpush1.bf16.msra.mxu0 %v2023
    %2275 = vmatprep.subr.bf16.mxu0 %v2016
    %2276 = vmatpush1.bf16.msra.mxu0 %v2015
    %2277 = vmatprep.subr.bf16.mxu0 %v2008
    %2278 = vmatpush1.bf16.msra.mxu0 %v2007
    %2279 = vmatprep.subr.bf16.mxu0 %v2128
    %2280 = vmatpush2.bf16.msra.mxu0 %v2127
    %2281 = vmatprep.subr.bf16.mxu0 %v2120
    %2282 = vmatpush2.bf16.msra.mxu0 %v2119
    %2283 = vmatprep.subr.bf16.mxu0 %v2112
    %2284 = vmatpush2.bf16.msra.mxu0 %v2111
    %2285 = vmatprep.subr.bf16.mxu0 %v2104
    %2286 = vmatpush2.bf16.msra.mxu0 %v2103
    %2287 = vmatprep.subr.bf16.mxu0 %v2096
    %2288 = vmatpush2.bf16.msra.mxu0 %v2095
    %2289 = vmatprep.subr.bf16.mxu0 %v2088
    %2290 = vmatpush2.bf16.msra.mxu0 %v2087
    %2291 = vmatprep.subr.bf16.mxu0 %v2080
    %2292 = vmatpush2.bf16.msra.mxu0 %v2079
    %2293 = vmatprep.subr.bf16.mxu0 %v2072
    %2294 = vmatpush2.bf16.msra.mxu0 %v2071
    %2295 = vmatprep.mubr.bf16.mxu0 %v1452
    %2296 = vmatmul.mubr.bf16.gmra.mxu0 %v1451
    %v2297 = vpop.f32.mrf.mxu0
    %v2298 = vadd.f32 %v1586, %v2297
    %v2299 = vpop.f32.mrf.mxu0
    %v2300 = vadd.f32 %v1590, %v2299
    %v2301 = vpop.f32.mrf.mxu0
    %v2302 = vpop.f32.mrf.mxu0
    %2303 = vdwg.mxu0
    %2304 = vmatprep.subr.bf16.mxu0 %v2066
    %2305 = vmatpush1.bf16.msra.mxu0 %v2065
    %2306 = vmatprep.subr.bf16.mxu0 %v2058
    %2307 = vmatpush1.bf16.msra.mxu0 %v2057
    %2308 = vmatprep.subr.bf16.mxu0 %v2050
    %2309 = vmatpush1.bf16.msra.mxu0 %v2049
    %2310 = vmatprep.subr.bf16.mxu0 %v2042
    %2311 = vmatpush1.bf16.msra.mxu0 %v2041
    %2312 = vmatprep.subr.bf16.mxu0 %v2034
    %2313 = vmatpush1.bf16.msra.mxu0 %v2033
    %2314 = vmatprep.subr.bf16.mxu0 %v2026
    %2315 = vmatpush1.bf16.msra.mxu0 %v2025
    %2316 = vmatprep.subr.bf16.mxu0 %v2018
    %2317 = vmatpush1.bf16.msra.mxu0 %v2017
    %2318 = vmatprep.subr.bf16.mxu0 %v2010
    %2319 = vmatpush1.bf16.msra.mxu0 %v2009
    %2320 = vmatprep.subr.bf16.mxu0 %v2130
    %2321 = vmatpush2.bf16.msra.mxu0 %v2129
    %2322 = vmatprep.subr.bf16.mxu0 %v2122
    %2323 = vmatpush2.bf16.msra.mxu0 %v2121
    %2324 = vmatprep.subr.bf16.mxu0 %v2114
    %2325 = vmatpush2.bf16.msra.mxu0 %v2113
    %2326 = vmatprep.subr.bf16.mxu0 %v2106
    %2327 = vmatpush2.bf16.msra.mxu0 %v2105
    %2328 = vmatprep.subr.bf16.mxu0 %v2098
    %2329 = vmatpush2.bf16.msra.mxu0 %v2097
    %2330 = vmatprep.subr.bf16.mxu0 %v2090
    %2331 = vmatpush2.bf16.msra.mxu0 %v2089
    %2332 = vmatprep.subr.bf16.mxu0 %v2082
    %2333 = vmatpush2.bf16.msra.mxu0 %v2081
    %2334 = vmatprep.subr.bf16.mxu0 %v2074
    %2335 = vmatpush2.bf16.msra.mxu0 %v2073
    %2336 = vmatprep.mubr.bf16.mxu0 %v1452
    %2337 = vmatmul.mubr.bf16.gmra.mxu0 %v1451
    %v2338 = vpop.f32.mrf.mxu0
    %v2339 = vadd.f32 %v1594, %v2338
    %v2340 = vpop.f32.mrf.mxu0
    %v2341 = vadd.f32 %v1598, %v2340
    %v2342 = vpop.f32.mrf.mxu0
    %v2343 = vpop.f32.mrf.mxu0
    %2344 = vdwg.mxu0
    %2345 = vmatprep.subr.bf16.mxu0 %v2068
    %2346 = vmatpush1.bf16.msra.mxu0 %v2067
    %2347 = vmatprep.subr.bf16.mxu0 %v2060
    %2348 = vmatpush1.bf16.msra.mxu0 %v2059
    %2349 = vmatprep.subr.bf16.mxu0 %v2052
    %2350 = vmatpush1.bf16.msra.mxu0 %v2051
    %2351 = vmatprep.subr.bf16.mxu0 %v2044
    %2352 = vmatpush1.bf16.msra.mxu0 %v2043
    %2353 = vmatprep.subr.bf16.mxu0 %v2036
    %2354 = vmatpush1.bf16.msra.mxu0 %v2035
    %2355 = vmatprep.subr.bf16.mxu0 %v2028
    %2356 = vmatpush1.bf16.msra.mxu0 %v2027
    %2357 = vmatprep.subr.bf16.mxu0 %v2020
    %2358 = vmatpush1.bf16.msra.mxu0 %v2019
    %2359 = vmatprep.subr.bf16.mxu0 %v2012
    %2360 = vmatpush1.bf16.msra.mxu0 %v2011
    %2361 = vmatprep.subr.bf16.mxu0 %v2132
    %2362 = vmatpush2.bf16.msra.mxu0 %v2131
    %2363 = vmatprep.subr.bf16.mxu0 %v2124
    %2364 = vmatpush2.bf16.msra.mxu0 %v2123
    %2365 = vmatprep.subr.bf16.mxu0 %v2116
    %2366 = vmatpush2.bf16.msra.mxu0 %v2115
    %2367 = vmatprep.subr.bf16.mxu0 %v2108
    %2368 = vmatpush2.bf16.msra.mxu0 %v2107
    %2369 = vmatprep.subr.bf16.mxu0 %v2100
    %2370 = vmatpush2.bf16.msra.mxu0 %v2099
    %2371 = vmatprep.subr.bf16.mxu0 %v2092
    %2372 = vmatpush2.bf16.msra.mxu0 %v2091
    %2373 = vmatprep.subr.bf16.mxu0 %v2084
    %2374 = vmatpush2.bf16.msra.mxu0 %v2083
    %2375 = vmatprep.subr.bf16.mxu0 %v2076
    %2376 = vmatpush2.bf16.msra.mxu0 %v2075
    %2377 = vmatprep.mubr.bf16.mxu0 %v1452
    %2378 = vmatmul.mubr.bf16.gmra.mxu0 %v1451
    %v2379 = vpop.f32.mrf.mxu0
    %v2380 = vadd.f32 %v1602, %v2379
    %v2381 = vpop.f32.mrf.mxu0
    %v2382 = vadd.f32 %v1606, %v2381
    %v2383 = vpop.f32.mrf.mxu0
    %v2384 = vpop.f32.mrf.mxu0
    %2385 = vdwg.mxu0
    %2386 = vmatprep.subr.bf16.mxu0 %v2070
    %2387 = vmatpush1.bf16.msra.mxu0 %v2069
    %2388 = vmatprep.subr.bf16.mxu0 %v2062
    %2389 = vmatpush1.bf16.msra.mxu0 %v2061
    %2390 = vmatprep.subr.bf16.mxu0 %v2054
    %2391 = vmatpush1.bf16.msra.mxu0 %v2053
    %2392 = vmatprep.subr.bf16.mxu0 %v2046
    %2393 = vmatpush1.bf16.msra.mxu0 %v2045
    %2394 = vmatprep.subr.bf16.mxu0 %v2038
    %2395 = vmatpush1.bf16.msra.mxu0 %v2037
    %2396 = vmatprep.subr.bf16.mxu0 %v2030
    %2397 = vmatpush1.bf16.msra.mxu0 %v2029
    %2398 = vmatprep.subr.bf16.mxu0 %v2022
    %2399 = vmatpush1.bf16.msra.mxu0 %v2021
    %2400 = vmatprep.subr.bf16.mxu0 %v2014
    %2401 = vmatpush1.bf16.msra.mxu0 %v2013
    %2402 = vmatprep.subr.bf16.mxu0 %v2134
    %2403 = vmatpush2.bf16.msra.mxu0 %v2133
    %2404 = vmatprep.subr.bf16.mxu0 %v2126
    %2405 = vmatpush2.bf16.msra.mxu0 %v2125
    %2406 = vmatprep.subr.bf16.mxu0 %v2118
    %2407 = vmatpush2.bf16.msra.mxu0 %v2117
    %2408 = vmatprep.subr.bf16.mxu0 %v2110
    %2409 = vmatpush2.bf16.msra.mxu0 %v2109
    %2410 = vmatprep.subr.bf16.mxu0 %v2102
    %2411 = vmatpush2.bf16.msra.mxu0 %v2101
    %2412 = vmatprep.subr.bf16.mxu0 %v2094
    %2413 = vmatpush2.bf16.msra.mxu0 %v2093
    %2414 = vmatprep.subr.bf16.mxu0 %v2086
    %2415 = vmatpush2.bf16.msra.mxu0 %v2085
    %2416 = vmatprep.subr.bf16.mxu0 %v2078
    %2417 = vmatpush2.bf16.msra.mxu0 %v2077
    %2418 = vmatprep.mubr.bf16.mxu0 %v1452
    %2419 = vmatmul.mubr.bf16.gmra.mxu0 %v1451
    %v2420 = vpop.f32.mrf.mxu0
    %v2421 = vadd.f32 %v1610, %v2420
    %v2422 = vpop.f32.mrf.mxu0
    %v2423 = vadd.f32 %v1614, %v2422
    %v2424 = vpop.f32.mrf.mxu0
    %v2425 = vpop.f32.mrf.mxu0
    %2426 = vdwg.mxu0
    %v2427 = vxor.u32 %v2298, 2147483648
    %v2428 = vxor.u32 %v2300, 2147483648
    %v2429 = vxor.u32 %v2339, 2147483648
    %v2430 = vxor.u32 %v2341, 2147483648
    %v2431 = vxor.u32 %v2380, 2147483648
    %v2432 = vxor.u32 %v2382, 2147483648
    %v2433 = vxor.u32 %v2421, 2147483648
    %v2434 = vxor.u32 %v2423, 2147483648
    %v2435 = vmul.f32 %v2427, 1.442695
    %v2436 = vpow.pop %v2435
    %v2437 = vmul.f32 %v2428, 1.442695
    %v2438 = vpow.pop %v2437
    %v2439 = vmul.f32 %v2429, 1.442695
    %v2440 = vpow.pop %v2439
    %v2441 = vmul.f32 %v2430, 1.442695
    %v2442 = vpow.pop %v2441
    %v2443 = vmul.f32 %v2431, 1.442695
    %v2444 = vpow.pop %v2443
    %v2445 = vmul.f32 %v2432, 1.442695
    %v2446 = vpow.pop %v2445
    %v2447 = vmul.f32 %v2433, 1.442695
    %v2448 = vpow.pop %v2447
    %v2449 = vmul.f32 %v2434, 1.442695
    %v2450 = vpow.pop %v2449
    %v2451 = vadd.f32 %v2436, 1.0
    %v2452 = vadd.f32 %v2438, 1.0
    %v2453 = vadd.f32 %v2440, 1.0
    %v2454 = vadd.f32 %v2442, 1.0
    %v2455 = vadd.f32 %v2444, 1.0
    %v2456 = vadd.f32 %v2446, 1.0
    %v2457 = vadd.f32 %v2448, 1.0
    %v2458 = vadd.f32 %v2450, 1.0
    %v2459 = vrcp.pop %v2451
    %v2460 = vmul.f32 1.0, %v2459
    %v2461 = vrcp.pop %v2452
    %v2462 = vmul.f32 1.0, %v2461
    %v2463 = vrcp.pop %v2453
    %v2464 = vmul.f32 1.0, %v2463
    %v2465 = vrcp.pop %v2454
    %v2466 = vmul.f32 1.0, %v2465
    %v2467 = vrcp.pop %v2455
    %v2468 = vmul.f32 1.0, %v2467
    %v2469 = vrcp.pop %v2456
    %v2470 = vmul.f32 1.0, %v2469
    %v2471 = vrcp.pop %v2457
    %v2472 = vmul.f32 1.0, %v2471
    %v2473 = vrcp.pop %v2458
    %v2474 = vmul.f32 1.0, %v2473
    %2475 = vst [vmem:[%s13] sm:$0xff] %v2460
    %2476 = vst [vmem:[%s13 + $0x8] sm:$0xff] %v2462
    %2477 = vst [vmem:[%s13 + $0x10] sm:$0xff] %v2464
    %2478 = vst [vmem:[%s13 + $0x18] sm:$0xff] %v2466
    %2479 = vst [vmem:[%s13 + $0x20] sm:$0xff] %v2468
    %2480 = vst [vmem:[%s13 + $0x28] sm:$0xff] %v2470
    %2481 = vst [vmem:[%s13 + $0x30] sm:$0xff] %v2472
    %2482 = vst [vmem:[%s13 + $0x38] sm:$0xff] %v2474
    // Predicated region
    $region54: #{vae_forward.1} parent=1 // pred_check
      _
    $region55: #{vae_forward.1} parent=1 // pred_check_branch
      %2484 = sbr.rel (0) target = $region57
    $region56: #{vae_forward.1} parent=1 // pred_region
      _
    $region57: #{vae_forward.1} parent=1 // pred_fallthru
      _
    // Predicated region
    $region58: #{vae_forward.1} parent=1 // pred_check
      _
    $region59: #{vae_forward.1} parent=1 // pred_check_branch
      %2486 = sbr.rel (0) target = $region61
    $region60: #{vae_forward.1} parent=1 // pred_region
      _
    $region61: #{vae_forward.1} parent=1 // pred_fallthru
      _
    // Predicated region
    $region62: #{vae_forward.1} parent=1 // pred_check
      _
    $region63: #{vae_forward.1} parent=1 // pred_check_branch
      %2488 = sbr.rel (0) target = $region65
    $region64: #{vae_forward.1} parent=1 // pred_region
      _
    $region65: #{vae_forward.1} parent=1 // pred_fallthru
      _
    // Predicated region
    $region66: #{vae_forward.1} parent=1 // pred_check
      _
    $region67: #{vae_forward.1} parent=1 // pred_check_branch
      %2490 = sbr.rel (0) target = $region69
    $region68: #{vae_forward.1} parent=1 // pred_region
      _
    $region69: #{vae_forward.1} parent=1 // pred_fallthru
      _
    // Predicated region
    $region70: #{vae_forward.1} parent=1 // pred_check
      _
    $region71: #{vae_forward.1} parent=1 // pred_check_branch
      %2492 = sbr.rel (0) target = $region73
    $region72: #{vae_forward.1} parent=1 // pred_region
      _
    $region73: #{vae_forward.1} parent=1 // pred_fallthru
      _
    // Predicated region
    $region74: #{vae_forward.1} parent=1 // pred_check
      _
    $region75: #{vae_forward.1} parent=1 // pred_check_branch
      %2494 = sbr.rel (0) target = $region77
    $region76: #{vae_forward.1} parent=1 // pred_region
      _
    $region77: #{vae_forward.1} parent=1 // pred_fallthru
      _
    // Predicated region
    $region78: #{vae_forward.1} parent=1 // pred_check
      _
    $region79: #{vae_forward.1} parent=1 // pred_check_branch
      %2496 = sbr.rel (0) target = $region81
    $region80: #{vae_forward.1} parent=1 // pred_region
      _
    $region81: #{vae_forward.1} parent=1 // pred_fallthru
      _
    // Predicated region
    $region82: #{vae_forward.1} parent=1 // pred_check
      _
    $region83: #{vae_forward.1} parent=1 // pred_check_branch
      %2498 = sbr.rel (0) target = $region85
    $region84: #{vae_forward.1} parent=1 // pred_region
      _
    $region85: #{vae_forward.1} parent=1 // pred_fallthru
      _
    %2499 = vsyncpa [#allocation3], 1
    %2500 = vsyncpa [#allocation5], 1

</llo_original>
